<compile_context>
chip_gen: v5e
topology: v5e:2x2
jax: 0.10.0
libtpu: 0.0.40
codegen_flags: <defaults>
</compile_context>

<pallas_src>
import functools

import jax
import jax.numpy as jnp
from jax.experimental import pallas as pl
from jax.experimental.pallas import tpu as pltpu


# ----------------------------------------------------------------------------
# In-kernel helper: 3x3 "same" conv on a pre-padded VMEM tile (full im2col).
# ----------------------------------------------------------------------------
def _conv3x3_same(pad_ref, col_ref, w_ref, b_ref, hh, ww):
    """pad_ref: (hh+2, ww+2, C)  zero-halo input (VMEM scratch)
       col_ref: (>=hh*ww, 9*C)   shared im2col scratch (only rows [0:hh*ww] used)
       w_ref:   (9*C, C)         weights, row = (dj*3 + di)*C + cin
       b_ref:   (1, C)
       returns  (hh*ww, C) float32
    """
    C = b_ref.shape[-1]
    m = hh * ww
    for dj in range(3):
        # One sublane-shifted view per column tap (3 wide loads instead of 9).
        shifted = pad_ref[:, dj:dj + ww, :]                      # (hh+2, ww, C)
        for di in range(3):
            t = dj * 3 + di
            col_ref[0:m, t * C:(t + 1) * C] = shifted[di:di + hh].reshape(m, C)
    # Single K = 9*C = 1152 dot -> best MXU fill, one result pop per conv.
    acc = jnp.dot(col_ref[0:m, :], w_ref[...], preferred_element_type=jnp.float32)
    return acc + b_ref[...]                                      # bias once, broadcast (1, C)


# ----------------------------------------------------------------------------
# Fused GCA kernel: one batch element per grid step.
# ----------------------------------------------------------------------------
def _gca_kernel(p, hi_ref, lo_ref, wh_ref, bh_ref, wl_ref, bl_ref, wd_ref, bd_ref,
                o_ref, hp_ref, lp_ref, col_ref):
    _, H, W, C = hi_ref.shape
    _, h, w, _ = lo_ref.shape

    # ---- zero-halo padding inside VMEM (== Conv2d padding=1, zeros). Re-zeroed
    #      every step so the kernel stays correct when the "parallel" batch axis
    #      is split across TensorCores (each core owns a private scratch). ----
    hp_ref[...] = jnp.zeros_like(hp_ref)
    hp_ref[1:H + 1, 1:W + 1, :] = hi_ref[0]
    lp_ref[...] = jnp.zeros_like(lp_ref)
    lp_ref[1:h + 1, 1:w + 1, :] = lo_ref[0]

    # ---- conv_l / conv_h (shared im2col scratch; low uses the leading rows) ----
    low_c = _conv3x3_same(lp_ref, col_ref, wl_ref, bl_ref, h, w)         # (h*w, C)
    # ---- global-context attention: spatial mean of conv_l output ----
    attn = jnp.mean(low_c, axis=0, keepdims=True)                        # (1, C)
    high_c = _conv3x3_same(hp_ref, col_ref, wh_ref, bh_ref, H, W)        # (H*W, C)

    # ---- attention-scaled high path; deconv bias added exactly once here
    #      (the p*p output phases below partition the output, so this is exact) ----
    base = attn * high_c + bd_ref[...]                                   # (H*W, C)
    base4 = base.reshape(h, p, W, C)                                     # (i, ki, jj, c)

    # ---- ConvTranspose2d(kernel=p, stride=p) as ONE dense matmul on low_c ----
    # dec[m, (ki*p + kj)*C + cout] = sum_cin low_c[m, cin] * Wd[cin, cout, ki, kj]
    dec = jnp.dot(low_c, wd_ref[...], preferred_element_type=jnp.float32)  # (h*w, p*p*C)

    # ---- interleave into the (h, p, W, C) output block:
    #      kj-phase is contiguous inside each row group (pure reshape),
    #      ki-phase is a static index into the output block. ----
    for ki in range(p):
        row = dec[:, ki * p * C:(ki + 1) * p * C].reshape(h, W, C)       # (h, W, C)
        o_ref[:, ki, :, :] = (base4[:, ki, :, :] + row).astype(o_ref.dtype)


# ----------------------------------------------------------------------------
# Wrapper: weight re-layout (tiny, host-side) + single pallas_call.
# ----------------------------------------------------------------------------
def gca_module(high_f, low_f, params, p):
    """GCAModule forward. high_f: (N, H, W, 128), low_f: (N, H/p, W/p, 128)."""
    N, H, W, C = high_f.shape
    _, h, w, _ = low_f.shape
    assert H == h * p and W == w * p

    # Weight-only host re-layouts (negligible; could be precomputed once).
    # Conv weight rows ordered as (dj*3 + di)*C + cin to match the im2col fill order.
    wh_g = params["wh"].transpose(1, 0, 2, 3).reshape(9 * C, C)
    wl_g = params["wl"].transpose(1, 0, 2, 3).reshape(9 * C, C)
    wd_m = params["wd"].transpose(2, 0, 1, 3).reshape(C, p * p * C)  # [cin, (ki, kj, cout)]
    bh = params["bh"].reshape(1, C)
    bl = params["bl"].reshape(1, C)
    bd = params["bd"].reshape(1, C)

    # Output written as (N*h, p, W, C); collapsing it to (N, H, W, C) afterwards is a
    # free row-major reshape (no data movement).
    # TODO(synk): for large H/W add a row-tiled grid axis (with 1-row halo) so the
    # per-step VMEM footprint stays within v7x's 64 MiB.
    out5 = pl.pallas_call(
        functools.partial(_gca_kernel, p),
        out_shape=jax.ShapeDtypeStruct((N * h, p, W, C), high_f.dtype),
        grid_spec=pltpu.PrefetchScalarGridSpec(
            num_scalar_prefetch=0,
            grid=(N,),
            in_specs=[
                pl.BlockSpec((1, H, W, C), lambda n: (n, 0, 0, 0)),
                pl.BlockSpec((1, h, w, C), lambda n: (n, 0, 0, 0)),
                pl.BlockSpec((9 * C, C), lambda n: (0, 0)),       # conv_h weight (revisited)
                pl.BlockSpec((1, C), lambda n: (0, 0)),
                pl.BlockSpec((9 * C, C), lambda n: (0, 0)),       # conv_l weight (revisited)
                pl.BlockSpec((1, C), lambda n: (0, 0)),
                pl.BlockSpec((C, p * p * C), lambda n: (0, 0)),   # dconv weight (revisited)
                pl.BlockSpec((1, C), lambda n: (0, 0)),
            ],
            out_specs=pl.BlockSpec((h, p, W, C), lambda n: (n, 0, 0, 0)),
            scratch_shapes=[
                pltpu.VMEM((H + 2, W + 2, C), jnp.float32),   # padded high_f
                pltpu.VMEM((h + 2, w + 2, C), jnp.float32),   # padded low_f
                pltpu.VMEM((H * W, 9 * C), jnp.float32),      # shared im2col scratch
            ]),
        compiler_params=pltpu.CompilerParams(
            dimension_semantics=("parallel",)),                # batch across TensorCores
    )(high_f, low_f, wh_g, bh, wl_g, bl, wd_m, bd)
    return out5.reshape(N, H, W, C)


# ----------------------------------------------------------------------------
# Pure-JAX reference (identical math, no Pallas) for validation.
# ----------------------------------------------------------------------------
def ref_gca(high_f, low_f, params, p):
    def conv3(x, w, b):
        y = jax.lax.conv_general_dilated(
            x, w, window_strides=(1, 1), padding="SAME",
            dimension_numbers=("NHWC", "HWIO", "NHWC"))
        return y + b[None, None, None, :]

    hc = conv3(high_f, params["wh"], params["bh"])
    lc = conv3(low_f, params["wl"], params["bl"])
    attn = jnp.mean(lc, axis=(1, 2), keepdims=True)
    hi = attn * hc
    N, h, w, C = lc.shape
    dec = jnp.einsum("nijc,klcd->nikjld", lc, params["wd"])
    dec = dec.reshape(N, h * p, w * p, C) + params["bd"][None, None, None, :]
    return dec + hi


if __name__ == "__main__":
    key = jax.random.PRNGKey(0)
    index = 2                      # GCAModule(index=2)  ->  p = 2
    p = 2 ** (index - 1)
    N, C = 2, 128                  # channels fixed at 128 by the module
    H = W = 8                      # high_f spatial
    h = w = H // p                 # low_f spatial (so dconv output matches high_f)

    ks = jax.random.split(key, 8)
    high_f = jax.random.normal(ks[0], (N, H, W, C), jnp.float32)
    low_f = jax.random.normal(ks[1], (N, h, w, C), jnp.float32)

    # Deterministic synthetic parameters (shapes from the module __init__).
    params = dict(
        wh=jax.random.normal(ks[2], (3, 3, C, C), jnp.float32) * 0.05,
        bh=jax.random.normal(ks[3], (C,), jnp.float32) * 0.05,
        wl=jax.random.normal(ks[4], (3, 3, C, C), jnp.float32) * 0.05,
        bl=jax.random.normal(ks[5], (C,), jnp.float32) * 0.05,
        wd=jax.random.normal(ks[6], (p, p, C, C), jnp.float32) * 0.05,
        bd=jax.random.normal(ks[7], (C,), jnp.float32) * 0.05,
    )

    out = jax.block_until_ready(gca_module(high_f, low_f, params, p))
    ref = jax.block_until_ready(ref_gca(high_f, low_f, params, p))

    assert out.shape == (N, H, W, C), out.shape
    max_err = float(jnp.max(jnp.abs(out - ref)))
    assert jnp.allclose(out, ref, rtol=1e-3, atol=1e-3), max_err
    print("KERNEL_OK")
</pallas_src>

<mosaic_0001>
module attributes {stable_mosaic.version = 11 : i64} {
  func.func @_gca_kernel(%arg0: i32, %arg1: memref<1x8x8x128xf32, #tpu.memory_space<vmem>>, %arg2: memref<1x4x4x128xf32, #tpu.memory_space<vmem>>, %arg3: memref<1152x128xf32, #tpu.memory_space<vmem>>, %arg4: memref<1x128xf32, #tpu.memory_space<vmem>>, %arg5: memref<1152x128xf32, #tpu.memory_space<vmem>>, %arg6: memref<1x128xf32, #tpu.memory_space<vmem>>, %arg7: memref<128x512xf32, #tpu.memory_space<vmem>>, %arg8: memref<1x128xf32, #tpu.memory_space<vmem>>, %arg9: memref<4x2x8x128xf32, #tpu.memory_space<vmem>>, %arg10: memref<10x10x128xf32, #tpu.memory_space<vmem>>, %arg11: memref<6x6x128xf32, #tpu.memory_space<vmem>>, %arg12: memref<64x1152xf32, #tpu.memory_space<vmem>>) attributes {dimension_semantics = [#tpu.dimension_semantics<parallel>], iteration_bounds = array<i64: 2>, scalar_prefetch = 0 : i64, scratch_operands = 3 : i64, tpu.core_type = #tpu.core_type<tc>, window_params = [{transform_indices = @transform_0, window_bounds = array<i64: 1, 8, 8, 128>}, {transform_indices = @transform_1, window_bounds = array<i64: 1, 4, 4, 128>}, {pipeline_mode = #tpu.pipeline_mode<synchronous>, transform_indices = @transform_2, window_bounds = array<i64: 1152, 128>}, {pipeline_mode = #tpu.pipeline_mode<synchronous>, transform_indices = @transform_3, window_bounds = array<i64: 1, 128>}, {pipeline_mode = #tpu.pipeline_mode<synchronous>, transform_indices = @transform_4, window_bounds = array<i64: 1152, 128>}, {pipeline_mode = #tpu.pipeline_mode<synchronous>, transform_indices = @transform_5, window_bounds = array<i64: 1, 128>}, {pipeline_mode = #tpu.pipeline_mode<synchronous>, transform_indices = @transform_6, window_bounds = array<i64: 128, 512>}, {pipeline_mode = #tpu.pipeline_mode<synchronous>, transform_indices = @transform_7, window_bounds = array<i64: 1, 128>}, {transform_indices = @transform_8, window_bounds = array<i64: 4, 2, 8, 128>}]} {
    %cst = arith.constant 0.000000e+00 : f32
    %0 = vector.broadcast %cst : f32 to vector<10x10x128xf32>
    %c0 = arith.constant 0 : index
    %c0_0 = arith.constant 0 : index
    %c0_1 = arith.constant 0 : index
    %1 = vector.load %arg10[%c0, %c0_0, %c0_1] : memref<10x10x128xf32, #tpu.memory_space<vmem>>, vector<10x10x128xf32>
    tpu.vector_store %arg10[%c0, %c0_0, %c0_1], %0 {strides = array<i32>} : memref<10x10x128xf32, #tpu.memory_space<vmem>>, vector<10x10x128xf32>,
    %c0_2 = arith.constant 0 : index
    %c0_3 = arith.constant 0 : index
    %c0_4 = arith.constant 0 : index
    %c0_5 = arith.constant 0 : index
    %2 = vector.load %arg1[%c0_2, %c0_3, %c0_4, %c0_5] : memref<1x8x8x128xf32, #tpu.memory_space<vmem>>, vector<1x8x8x128xf32>
    %3 = vector.shape_cast %2 : vector<1x8x8x128xf32> to vector<8x8x128xf32>
    %c1 = arith.constant 1 : index
    %c1_6 = arith.constant 1 : index
    %c0_7 = arith.constant 0 : index
    %4 = vector.load %arg10[%c1, %c1_6, %c0_7] : memref<10x10x128xf32, #tpu.memory_space<vmem>>, vector<8x8x128xf32>
    tpu.vector_store %arg10[%c1, %c1_6, %c0_7], %3 {strides = array<i32>} : memref<10x10x128xf32, #tpu.memory_space<vmem>>, vector<8x8x128xf32>,
    %cst_8 = arith.constant 0.000000e+00 : f32
    %5 = vector.broadcast %cst_8 : f32 to vector<6x6x128xf32>
    %c0_9 = arith.constant 0 : index
    %c0_10 = arith.constant 0 : index
    %c0_11 = arith.constant 0 : index
    %6 = vector.load %arg11[%c0_9, %c0_10, %c0_11] : memref<6x6x128xf32, #tpu.memory_space<vmem>>, vector<6x6x128xf32>
    tpu.vector_store %arg11[%c0_9, %c0_10, %c0_11], %5 {strides = array<i32>} : memref<6x6x128xf32, #tpu.memory_space<vmem>>, vector<6x6x128xf32>,
    %c0_12 = arith.constant 0 : index
    %c0_13 = arith.constant 0 : index
    %c0_14 = arith.constant 0 : index
    %c0_15 = arith.constant 0 : index
    %7 = vector.load %arg2[%c0_12, %c0_13, %c0_14, %c0_15] : memref<1x4x4x128xf32, #tpu.memory_space<vmem>>, vector<1x4x4x128xf32>
    %8 = vector.shape_cast %7 : vector<1x4x4x128xf32> to vector<4x4x128xf32>
    %c1_16 = arith.constant 1 : index
    %c1_17 = arith.constant 1 : index
    %c0_18 = arith.constant 0 : index
    %9 = vector.load %arg11[%c1_16, %c1_17, %c0_18] : memref<6x6x128xf32, #tpu.memory_space<vmem>>, vector<4x4x128xf32>
    tpu.vector_store %arg11[%c1_16, %c1_17, %c0_18], %8 {strides = array<i32>} : memref<6x6x128xf32, #tpu.memory_space<vmem>>, vector<4x4x128xf32>,
    %c0_19 = arith.constant 0 : index
    %c0_20 = arith.constant 0 : index
    %c0_21 = arith.constant 0 : index
    %10 = vector.load %arg11[%c0_19, %c0_20, %c0_21] : memref<6x6x128xf32, #tpu.memory_space<vmem>>, vector<6x4x128xf32>
    %11 = vector.extract_strided_slice %10 {offsets = [0, 0, 0], sizes = [4, 4, 128], strides = [1, 1, 1]} : vector<6x4x128xf32> to vector<4x4x128xf32>
    %12 = vector.shape_cast %11 : vector<4x4x128xf32> to vector<16x128xf32>
    %c0_22 = arith.constant 0 : index
    %c0_23 = arith.constant 0 : index
    %13 = vector.load %arg12[%c0_22, %c0_23] : memref<64x1152xf32, #tpu.memory_space<vmem>>, vector<16x128xf32>
    tpu.vector_store %arg12[%c0_22, %c0_23], %12 {strides = array<i32>} : memref<64x1152xf32, #tpu.memory_space<vmem>>, vector<16x128xf32>,
    %14 = vector.extract_strided_slice %10 {offsets = [1, 0, 0], sizes = [4, 4, 128], strides = [1, 1, 1]} : vector<6x4x128xf32> to vector<4x4x128xf32>
    %15 = vector.shape_cast %14 : vector<4x4x128xf32> to vector<16x128xf32>
    %c0_24 = arith.constant 0 : index
    %c128 = arith.constant 128 : index
    %16 = vector.load %arg12[%c0_24, %c128] : memref<64x1152xf32, #tpu.memory_space<vmem>>, vector<16x128xf32>
    tpu.vector_store %arg12[%c0_24, %c128], %15 {strides = array<i32>} : memref<64x1152xf32, #tpu.memory_space<vmem>>, vector<16x128xf32>,
    %17 = vector.extract_strided_slice %10 {offsets = [2, 0, 0], sizes = [4, 4, 128], strides = [1, 1, 1]} : vector<6x4x128xf32> to vector<4x4x128xf32>
    %18 = vector.shape_cast %17 : vector<4x4x128xf32> to vector<16x128xf32>
    %c0_25 = arith.constant 0 : index
    %c256 = arith.constant 256 : index
    %19 = vector.load %arg12[%c0_25, %c256] : memref<64x1152xf32, #tpu.memory_space<vmem>>, vector<16x128xf32>
    tpu.vector_store %arg12[%c0_25, %c256], %18 {strides = array<i32>} : memref<64x1152xf32, #tpu.memory_space<vmem>>, vector<16x128xf32>,
    %c0_26 = arith.constant 0 : index
    %c1_27 = arith.constant 1 : index
    %c0_28 = arith.constant 0 : index
    %20 = vector.load %arg11[%c0_26, %c1_27, %c0_28] : memref<6x6x128xf32, #tpu.memory_space<vmem>>, vector<6x4x128xf32>
    %21 = vector.extract_strided_slice %20 {offsets = [0, 0, 0], sizes = [4, 4, 128], strides = [1, 1, 1]} : vector<6x4x128xf32> to vector<4x4x128xf32>
    %22 = vector.shape_cast %21 : vector<4x4x128xf32> to vector<16x128xf32>
    %c0_29 = arith.constant 0 : index
    %c384 = arith.constant 384 : index
    %23 = vector.load %arg12[%c0_29, %c384] : memref<64x1152xf32, #tpu.memory_space<vmem>>, vector<16x128xf32>
    tpu.vector_store %arg12[%c0_29, %c384], %22 {strides = array<i32>} : memref<64x1152xf32, #tpu.memory_space<vmem>>, vector<16x128xf32>,
    %24 = vector.extract_strided_slice %20 {offsets = [1, 0, 0], sizes = [4, 4, 128], strides = [1, 1, 1]} : vector<6x4x128xf32> to vector<4x4x128xf32>
    %25 = vector.shape_cast %24 : vector<4x4x128xf32> to vector<16x128xf32>
    %c0_30 = arith.constant 0 : index
    %c512 = arith.constant 512 : index
    %26 = vector.load %arg12[%c0_30, %c512] : memref<64x1152xf32, #tpu.memory_space<vmem>>, vector<16x128xf32>
    tpu.vector_store %arg12[%c0_30, %c512], %25 {strides = array<i32>} : memref<64x1152xf32, #tpu.memory_space<vmem>>, vector<16x128xf32>,
    %27 = vector.extract_strided_slice %20 {offsets = [2, 0, 0], sizes = [4, 4, 128], strides = [1, 1, 1]} : vector<6x4x128xf32> to vector<4x4x128xf32>
    %28 = vector.shape_cast %27 : vector<4x4x128xf32> to vector<16x128xf32>
    %c0_31 = arith.constant 0 : index
    %c640 = arith.constant 640 : index
    %29 = vector.load %arg12[%c0_31, %c640] : memref<64x1152xf32, #tpu.memory_space<vmem>>, vector<16x128xf32>
    tpu.vector_store %arg12[%c0_31, %c640], %28 {strides = array<i32>} : memref<64x1152xf32, #tpu.memory_space<vmem>>, vector<16x128xf32>,
    %c0_32 = arith.constant 0 : index
    %c2 = arith.constant 2 : index
    %c0_33 = arith.constant 0 : index
    %30 = vector.load %arg11[%c0_32, %c2, %c0_33] : memref<6x6x128xf32, #tpu.memory_space<vmem>>, vector<6x4x128xf32>
    %31 = vector.extract_strided_slice %30 {offsets = [0, 0, 0], sizes = [4, 4, 128], strides = [1, 1, 1]} : vector<6x4x128xf32> to vector<4x4x128xf32>
    %32 = vector.shape_cast %31 : vector<4x4x128xf32> to vector<16x128xf32>
    %c0_34 = arith.constant 0 : index
    %c768 = arith.constant 768 : index
    %33 = vector.load %arg12[%c0_34, %c768] : memref<64x1152xf32, #tpu.memory_space<vmem>>, vector<16x128xf32>
    tpu.vector_store %arg12[%c0_34, %c768], %32 {strides = array<i32>} : memref<64x1152xf32, #tpu.memory_space<vmem>>, vector<16x128xf32>,
    %34 = vector.extract_strided_slice %30 {offsets = [1, 0, 0], sizes = [4, 4, 128], strides = [1, 1, 1]} : vector<6x4x128xf32> to vector<4x4x128xf32>
    %35 = vector.shape_cast %34 : vector<4x4x128xf32> to vector<16x128xf32>
    %c0_35 = arith.constant 0 : index
    %c896 = arith.constant 896 : index
    %36 = vector.load %arg12[%c0_35, %c896] : memref<64x1152xf32, #tpu.memory_space<vmem>>, vector<16x128xf32>
    tpu.vector_store %arg12[%c0_35, %c896], %35 {strides = array<i32>} : memref<64x1152xf32, #tpu.memory_space<vmem>>, vector<16x128xf32>,
    %37 = vector.extract_strided_slice %30 {offsets = [2, 0, 0], sizes = [4, 4, 128], strides = [1, 1, 1]} : vector<6x4x128xf32> to vector<4x4x128xf32>
    %38 = vector.shape_cast %37 : vector<4x4x128xf32> to vector<16x128xf32>
    %c0_36 = arith.constant 0 : index
    %c1024 = arith.constant 1024 : index
    %39 = vector.load %arg12[%c0_36, %c1024] : memref<64x1152xf32, #tpu.memory_space<vmem>>, vector<16x128xf32>
    tpu.vector_store %arg12[%c0_36, %c1024], %38 {strides = array<i32>} : memref<64x1152xf32, #tpu.memory_space<vmem>>, vector<16x128xf32>,
    %c0_37 = arith.constant 0 : index
    %c0_38 = arith.constant 0 : index
    %40 = vector.load %arg12[%c0_37, %c0_38] : memref<64x1152xf32, #tpu.memory_space<vmem>>, vector<16x1152xf32>
    %c0_39 = arith.constant 0 : index
    %c0_40 = arith.constant 0 : index
    %41 = vector.load %arg5[%c0_39, %c0_40] : memref<1152x128xf32, #tpu.memory_space<vmem>>, vector<1152x128xf32>
    %cst_41 = arith.constant dense<0.000000e+00> : vector<16x128xf32>
    %42 = tpu.matmul %40, %41, %cst_41 {dimension_numbers = #tpu.dot_dimension_numbers<[1], [0], [0], [1], [0, 0, 1, 1], [], []>} : vector<16x1152xf32>, vector<1152x128xf32>, vector<16x128xf32> -> vector<16x128xf32>
    %c0_42 = arith.constant 0 : index
    %c0_43 = arith.constant 0 : index
    %43 = vector.load %arg6[%c0_42, %c0_43] : memref<1x128xf32, #tpu.memory_space<vmem>>, vector<1x128xf32>
    %44 = vector.broadcast %43 : vector<1x128xf32> to vector<16x128xf32>
    %45 = arith.addf %42, %44 : vector<16x128xf32>
    %cst_44 = arith.constant dense<0.000000e+00> : vector<128xf32>
    %46 = vector.multi_reduction <add>, %45, %cst_44 [0] : vector<16x128xf32> to vector<128xf32>
    %47 = vector.shape_cast %46 : vector<128xf32> to vector<1x128xf32>
    %cst_45 = arith.constant 1.600000e+01 : f32
    %48 = vector.broadcast %cst_45 : f32 to vector<1x128xf32>
    %49 = arith.divf %47, %48 : vector<1x128xf32>
    %c0_46 = arith.constant 0 : index
    %c0_47 = arith.constant 0 : index
    %c0_48 = arith.constant 0 : index
    %50 = vector.load %arg10[%c0_46, %c0_47, %c0_48] : memref<10x10x128xf32, #tpu.memory_space<vmem>>, vector<10x8x128xf32>
    %51 = vector.extract_strided_slice %50 {offsets = [0, 0, 0], sizes = [8, 8, 128], strides = [1, 1, 1]} : vector<10x8x128xf32> to vector<8x8x128xf32>
    %52 = vector.shape_cast %51 : vector<8x8x128xf32> to vector<64x128xf32>
    %c0_49 = arith.constant 0 : index
    %c0_50 = arith.constant 0 : index
    %53 = vector.load %arg12[%c0_49, %c0_50] : memref<64x1152xf32, #tpu.memory_space<vmem>>, vector<64x128xf32>
    tpu.vector_store %arg12[%c0_49, %c0_50], %52 {strides = array<i32>} : memref<64x1152xf32, #tpu.memory_space<vmem>>, vector<64x128xf32>,
    %54 = vector.extract_strided_slice %50 {offsets = [1, 0, 0], sizes = [8, 8, 128], strides = [1, 1, 1]} : vector<10x8x128xf32> to vector<8x8x128xf32>
    %55 = vector.shape_cast %54 : vector<8x8x128xf32> to vector<64x128xf32>
    %c0_51 = arith.constant 0 : index
    %c128_52 = arith.constant 128 : index
    %56 = vector.load %arg12[%c0_51, %c128_52] : memref<64x1152xf32, #tpu.memory_space<vmem>>, vector<64x128xf32>
    tpu.vector_store %arg12[%c0_51, %c128_52], %55 {strides = array<i32>} : memref<64x1152xf32, #tpu.memory_space<vmem>>, vector<64x128xf32>,
    %57 = vector.extract_strided_slice %50 {offsets = [2, 0, 0], sizes = [8, 8, 128], strides = [1, 1, 1]} : vector<10x8x128xf32> to vector<8x8x128xf32>
    %58 = vector.shape_cast %57 : vector<8x8x128xf32> to vector<64x128xf32>
    %c0_53 = arith.constant 0 : index
    %c256_54 = arith.constant 256 : index
    %59 = vector.load %arg12[%c0_53, %c256_54] : memref<64x1152xf32, #tpu.memory_space<vmem>>, vector<64x128xf32>
    tpu.vector_store %arg12[%c0_53, %c256_54], %58 {strides = array<i32>} : memref<64x1152xf32, #tpu.memory_space<vmem>>, vector<64x128xf32>,
    %c0_55 = arith.constant 0 : index
    %c1_56 = arith.constant 1 : index
    %c0_57 = arith.constant 0 : index
    %60 = vector.load %arg10[%c0_55, %c1_56, %c0_57] : memref<10x10x128xf32, #tpu.memory_space<vmem>>, vector<10x8x128xf32>
    %61 = vector.extract_strided_slice %60 {offsets = [0, 0, 0], sizes = [8, 8, 128], strides = [1, 1, 1]} : vector<10x8x128xf32> to vector<8x8x128xf32>
    %62 = vector.shape_cast %61 : vector<8x8x128xf32> to vector<64x128xf32>
    %c0_58 = arith.constant 0 : index
    %c384_59 = arith.constant 384 : index
    %63 = vector.load %arg12[%c0_58, %c384_59] : memref<64x1152xf32, #tpu.memory_space<vmem>>, vector<64x128xf32>
    tpu.vector_store %arg12[%c0_58, %c384_59], %62 {strides = array<i32>} : memref<64x1152xf32, #tpu.memory_space<vmem>>, vector<64x128xf32>,
    %64 = vector.extract_strided_slice %60 {offsets = [1, 0, 0], sizes = [8, 8, 128], strides = [1, 1, 1]} : vector<10x8x128xf32> to vector<8x8x128xf32>
    %65 = vector.shape_cast %64 : vector<8x8x128xf32> to vector<64x128xf32>
    %c0_60 = arith.constant 0 : index
    %c512_61 = arith.constant 512 : index
    %66 = vector.load %arg12[%c0_60, %c512_61] : memref<64x1152xf32, #tpu.memory_space<vmem>>, vector<64x128xf32>
    tpu.vector_store %arg12[%c0_60, %c512_61], %65 {strides = array<i32>} : memref<64x1152xf32, #tpu.memory_space<vmem>>, vector<64x128xf32>,
    %67 = vector.extract_strided_slice %60 {offsets = [2, 0, 0], sizes = [8, 8, 128], strides = [1, 1, 1]} : vector<10x8x128xf32> to vector<8x8x128xf32>
    %68 = vector.shape_cast %67 : vector<8x8x128xf32> to vector<64x128xf32>
    %c0_62 = arith.constant 0 : index
    %c640_63 = arith.constant 640 : index
    %69 = vector.load %arg12[%c0_62, %c640_63] : memref<64x1152xf32, #tpu.memory_space<vmem>>, vector<64x128xf32>
    tpu.vector_store %arg12[%c0_62, %c640_63], %68 {strides = array<i32>} : memref<64x1152xf32, #tpu.memory_space<vmem>>, vector<64x128xf32>,
    %c0_64 = arith.constant 0 : index
    %c2_65 = arith.constant 2 : index
    %c0_66 = arith.constant 0 : index
    %70 = vector.load %arg10[%c0_64, %c2_65, %c0_66] : memref<10x10x128xf32, #tpu.memory_space<vmem>>, vector<10x8x128xf32>
    %71 = vector.extract_strided_slice %70 {offsets = [0, 0, 0], sizes = [8, 8, 128], strides = [1, 1, 1]} : vector<10x8x128xf32> to vector<8x8x128xf32>
    %72 = vector.shape_cast %71 : vector<8x8x128xf32> to vector<64x128xf32>
    %c0_67 = arith.constant 0 : index
    %c768_68 = arith.constant 768 : index
    %73 = vector.load %arg12[%c0_67, %c768_68] : memref<64x1152xf32, #tpu.memory_space<vmem>>, vector<64x128xf32>
    tpu.vector_store %arg12[%c0_67, %c768_68], %72 {strides = array<i32>} : memref<64x1152xf32, #tpu.memory_space<vmem>>, vector<64x128xf32>,
    %74 = vector.extract_strided_slice %70 {offsets = [1, 0, 0], sizes = [8, 8, 128], strides = [1, 1, 1]} : vector<10x8x128xf32> to vector<8x8x128xf32>
    %75 = vector.shape_cast %74 : vector<8x8x128xf32> to vector<64x128xf32>
    %c0_69 = arith.constant 0 : index
    %c896_70 = arith.constant 896 : index
    %76 = vector.load %arg12[%c0_69, %c896_70] : memref<64x1152xf32, #tpu.memory_space<vmem>>, vector<64x128xf32>
    tpu.vector_store %arg12[%c0_69, %c896_70], %75 {strides = array<i32>} : memref<64x1152xf32, #tpu.memory_space<vmem>>, vector<64x128xf32>,
    %77 = vector.extract_strided_slice %70 {offsets = [2, 0, 0], sizes = [8, 8, 128], strides = [1, 1, 1]} : vector<10x8x128xf32> to vector<8x8x128xf32>
    %78 = vector.shape_cast %77 : vector<8x8x128xf32> to vector<64x128xf32>
    %c0_71 = arith.constant 0 : index
    %c1024_72 = arith.constant 1024 : index
    %79 = vector.load %arg12[%c0_71, %c1024_72] : memref<64x1152xf32, #tpu.memory_space<vmem>>, vector<64x128xf32>
    tpu.vector_store %arg12[%c0_71, %c1024_72], %78 {strides = array<i32>} : memref<64x1152xf32, #tpu.memory_space<vmem>>, vector<64x128xf32>,
    %c0_73 = arith.constant 0 : index
    %c0_74 = arith.constant 0 : index
    %80 = vector.load %arg12[%c0_73, %c0_74] : memref<64x1152xf32, #tpu.memory_space<vmem>>, vector<64x1152xf32>
    %c0_75 = arith.constant 0 : index
    %c0_76 = arith.constant 0 : index
    %81 = vector.load %arg3[%c0_75, %c0_76] : memref<1152x128xf32, #tpu.memory_space<vmem>>, vector<1152x128xf32>
    %cst_77 = arith.constant dense<0.000000e+00> : vector<64x128xf32>
    %82 = tpu.matmul %80, %81, %cst_77 {dimension_numbers = #tpu.dot_dimension_numbers<[1], [0], [0], [1], [0, 0, 1, 1], [], []>} : vector<64x1152xf32>, vector<1152x128xf32>, vector<64x128xf32> -> vector<64x128xf32>
    %c0_78 = arith.constant 0 : index
    %c0_79 = arith.constant 0 : index
    %83 = vector.load %arg4[%c0_78, %c0_79] : memref<1x128xf32, #tpu.memory_space<vmem>>, vector<1x128xf32>
    %84 = vector.broadcast %83 : vector<1x128xf32> to vector<64x128xf32>
    %85 = arith.addf %82, %84 : vector<64x128xf32>
    %86 = vector.broadcast %49 : vector<1x128xf32> to vector<64x128xf32>
    %87 = arith.mulf %86, %85 : vector<64x128xf32>
    %c0_80 = arith.constant 0 : index
    %c0_81 = arith.constant 0 : index
    %88 = vector.load %arg8[%c0_80, %c0_81] : memref<1x128xf32, #tpu.memory_space<vmem>>, vector<1x128xf32>
    %89 = vector.broadcast %88 : vector<1x128xf32> to vector<64x128xf32>
    %90 = arith.addf %87, %89 : vector<64x128xf32>
    %91 = vector.shape_cast %90 : vector<64x128xf32> to vector<4x2x8x128xf32>
    %c0_82 = arith.constant 0 : index
    %c0_83 = arith.constant 0 : index
    %92 = vector.load %arg7[%c0_82, %c0_83] : memref<128x512xf32, #tpu.memory_space<vmem>>, vector<128x512xf32>
    %cst_84 = arith.constant dense<0.000000e+00> : vector<16x512xf32>
    %93 = tpu.matmul %45, %92, %cst_84 {dimension_numbers = #tpu.dot_dimension_numbers<[1], [0], [0], [1], [0, 0, 1, 1], [], []>} : vector<16x128xf32>, vector<128x512xf32>, vector<16x512xf32> -> vector<16x512xf32>
    %94 = vector.extract_strided_slice %93 {offsets = [0, 0], sizes = [16, 256], strides = [1, 1]} : vector<16x512xf32> to vector<16x256xf32>
    %95 = vector.shape_cast %94 : vector<16x256xf32> to vector<4x8x128xf32>
    %96 = vector.extract_strided_slice %91 {offsets = [0, 0, 0, 0], sizes = [4, 1, 8, 128], strides = [1, 1, 1, 1]} : vector<4x2x8x128xf32> to vector<4x1x8x128xf32>
    %97 = vector.shape_cast %96 : vector<4x1x8x128xf32> to vector<4x8x128xf32>
    %98 = arith.addf %97, %95 : vector<4x8x128xf32>
    %c0_85 = arith.constant 0 : index
    %c0_86 = arith.constant 0 : index
    %c0_87 = arith.constant 0 : index
    %c0_88 = arith.constant 0 : index
    %99 = vector.load %arg9[%c0_85, %c0_86, %c0_87, %c0_88] : memref<4x2x8x128xf32, #tpu.memory_space<vmem>>, vector<4x1x8x128xf32>
    %100 = vector.shape_cast %99 : vector<4x1x8x128xf32> to vector<4x8x128xf32>
    %101 = vector.shape_cast %98 : vector<4x8x128xf32> to vector<4x1x8x128xf32>
    tpu.vector_store %arg9[%c0_85, %c0_86, %c0_87, %c0_88], %101 {strides = array<i32>} : memref<4x2x8x128xf32, #tpu.memory_space<vmem>>, vector<4x1x8x128xf32>,
    %102 = vector.extract_strided_slice %93 {offsets = [0, 256], sizes = [16, 256], strides = [1, 1]} : vector<16x512xf32> to vector<16x256xf32>
    %103 = vector.shape_cast %102 : vector<16x256xf32> to vector<4x8x128xf32>
    %104 = vector.extract_strided_slice %91 {offsets = [0, 1, 0, 0], sizes = [4, 1, 8, 128], strides = [1, 1, 1, 1]} : vector<4x2x8x128xf32> to vector<4x1x8x128xf32>
    %105 = vector.shape_cast %104 : vector<4x1x8x128xf32> to vector<4x8x128xf32>
    %106 = arith.addf %105, %103 : vector<4x8x128xf32>
    %c0_89 = arith.constant 0 : index
    %c1_90 = arith.constant 1 : index
    %c0_91 = arith.constant 0 : index
    %c0_92 = arith.constant 0 : index
    %107 = vector.load %arg9[%c0_89, %c1_90, %c0_91, %c0_92] : memref<4x2x8x128xf32, #tpu.memory_space<vmem>>, vector<4x1x8x128xf32>
    %108 = vector.shape_cast %107 : vector<4x1x8x128xf32> to vector<4x8x128xf32>
    %109 = vector.shape_cast %106 : vector<4x8x128xf32> to vector<4x1x8x128xf32>
    tpu.vector_store %arg9[%c0_89, %c1_90, %c0_91, %c0_92], %109 {strides = array<i32>} : memref<4x2x8x128xf32, #tpu.memory_space<vmem>>, vector<4x1x8x128xf32>,
    return
  }
  func.func @transform_0(%arg0: i32) -> (i32, i32, i32, i32) {
    %c0_i32 = arith.constant 0 : i32
    %c0_i32_0 = arith.constant 0 : i32
    %c0_i32_1 = arith.constant 0 : i32
    %c0_i32_2 = arith.constant 0 : i32
    return %arg0, %c0_i32, %c0_i32_0, %c0_i32_1 : i32, i32, i32, i32
  }
  func.func @transform_1(%arg0: i32) -> (i32, i32, i32, i32) {
    %c0_i32 = arith.constant 0 : i32
    %c0_i32_0 = arith.constant 0 : i32
    %c0_i32_1 = arith.constant 0 : i32
    %c0_i32_2 = arith.constant 0 : i32
    return %arg0, %c0_i32, %c0_i32_0, %c0_i32_1 : i32, i32, i32, i32
  }
  func.func @transform_2(%arg0: i32) -> (i32, i32) {
    %c0_i32 = arith.constant 0 : i32
    %c0_i32_0 = arith.constant 0 : i32
    %c0_i32_1 = arith.constant 0 : i32
    return %c0_i32, %c0_i32_0 : i32, i32
  }
  func.func @transform_3(%arg0: i32) -> (i32, i32) {
    %c0_i32 = arith.constant 0 : i32
    %c0_i32_0 = arith.constant 0 : i32
    %c0_i32_1 = arith.constant 0 : i32
    return %c0_i32, %c0_i32_0 : i32, i32
  }
  func.func @transform_4(%arg0: i32) -> (i32, i32) {
    %c0_i32 = arith.constant 0 : i32
    %c0_i32_0 = arith.constant 0 : i32
    %c0_i32_1 = arith.constant 0 : i32
    return %c0_i32, %c0_i32_0 : i32, i32
  }
  func.func @transform_5(%arg0: i32) -> (i32, i32) {
    %c0_i32 = arith.constant 0 : i32
    %c0_i32_0 = arith.constant 0 : i32
    %c0_i32_1 = arith.constant 0 : i32
    return %c0_i32, %c0_i32_0 : i32, i32
  }
  func.func @transform_6(%arg0: i32) -> (i32, i32) {
    %c0_i32 = arith.constant 0 : i32
    %c0_i32_0 = arith.constant 0 : i32
    %c0_i32_1 = arith.constant 0 : i32
    return %c0_i32, %c0_i32_0 : i32, i32
  }
  func.func @transform_7(%arg0: i32) -> (i32, i32) {
    %c0_i32 = arith.constant 0 : i32
    %c0_i32_0 = arith.constant 0 : i32
    %c0_i32_1 = arith.constant 0 : i32
    return %c0_i32, %c0_i32_0 : i32, i32
  }
  func.func @transform_8(%arg0: i32) -> (i32, i32, i32, i32) {
    %c0_i32 = arith.constant 0 : i32
    %c0_i32_0 = arith.constant 0 : i32
    %c0_i32_1 = arith.constant 0 : i32
    %c0_i32_2 = arith.constant 0 : i32
    return %arg0, %c0_i32, %c0_i32_0, %c0_i32_1 : i32, i32, i32, i32
  }
}

</mosaic_0001>

<llo_original>
// kernel: tpu_custom_call.1
$region0: #{tpu_custom_call.1}
  #allocation0 [shape = 'u32[]', space=smem, size = 0x4, offset = 0x4, fixed_abs, tag = 'smem constant byte address 0x4 - core index']
  #allocation1 [shape = 'u32[72,128]{1,0:T(1,128)}', space=vmem, size = 0x9000, scoped, tag = 'internal scratch']
  #allocation2 [shape = 'f32[10,10,128]{2,1,0:T(8,128)}', space=vmem, size = 0x14000, scoped, tag = 'scratch operand']
  #allocation3 [shape = 'f32[6,6,128]{2,1,0:T(8,128)}', space=vmem, size = 0x6000, scoped, tag = 'scratch operand']
  #allocation4 [shape = 'f32[64,1152]{1,0:T(8,128)}', space=vmem, size = 0x48000, scoped, tag = 'scratch operand']
  %s0 = inlined_call_operand.hbm [shape: f32[2,8,8,128], index: 0, kind: input, shape index: {}]
  %s1 = inlined_call_operand.hbm [shape: f32[2,4,4,128], index: 1, kind: input, shape index: {}]
  %s2 = inlined_call_operand.hbm [shape: f32[1152,128], index: 2, kind: input, shape index: {}]
  %s3 = inlined_call_operand.vmem [shape: f32[1,128], index: 3, kind: input, shape index: {}]
  %s4 = inlined_call_operand.hbm [shape: f32[1152,128], index: 4, kind: input, shape index: {}]
  %s5 = inlined_call_operand.vmem [shape: f32[1,128], index: 5, kind: input, shape index: {}]
  %s6 = inlined_call_operand.hbm [shape: f32[128,512], index: 6, kind: input, shape index: {}]
  %s7 = inlined_call_operand.vmem [shape: f32[1,128], index: 7, kind: input, shape index: {}]
  %s8 = inlined_call_operand.hbm [shape: f32[8,2,8,128], index: 8, kind: output, shape index: {}]
  %s9 = sld [smem:[#allocation0]]
  $region85: #{tpu_custom_call.1} parent=0
    _
  %s11 = ssub.s32 1, %s9
  %s12 = scalar_select 0, %s11, %s9
  $region1: #{tpu_custom_call.1} parent=0
    #allocation5 [shape = 'u8[65536]{0}', space=vmem, size = 0x10000, scoped, tag = 'input window, operand 0']
    #allocation6 [shape = 's32[2]{0}', space=sflag, size = 0x8, scoped, tag = 'scoped memory for tpu_custom_call.1']
    #allocation7 [shape = 's32[2]{0}', space=sflag, size = 0x8, scoped, tag = 'scoped memory for tpu_custom_call.1']
    #allocation8 [shape = 'u8[16384]{0}', space=vmem, size = 0x4000, scoped, tag = 'input window, operand 1']
    #allocation9 [shape = 's32[2]{0}', space=sflag, size = 0x8, scoped, tag = 'scoped memory for tpu_custom_call.1']
    #allocation10 [shape = 'u8[589824]{0}', space=vmem, size = 0x90000, scoped, tag = 'input window, operand 2, single buffered']
    #allocation11 [shape = 'u8[589824]{0}', space=vmem, size = 0x90000, scoped, tag = 'input window, operand 4, single buffered']
    #allocation12 [shape = 's32[1]{0}', space=sflag, size = 0x4, scoped, tag = 'scoped memory for tpu_custom_call.1']
    #allocation13 [shape = 'u8[262144]{0}', space=vmem, size = 0x40000, scoped, tag = 'input window, operand 6, single buffered']
    #allocation14 [shape = 'u8[65536]{0}', space=vmem, size = 0x10000, scoped, tag = 'output window, operand 0']
    %13 = vsyncpa [#allocation6], 0
    %s14 = scalar_lea.sflag [#allocation6], 1
    %15 = vsyncpa %s14, 0
    %16 = vsyncpa [#allocation9], 0
    %s17 = scalar_lea.sflag [#allocation9], 1
    %18 = vsyncpa %s17, 0
    %19 = vsyncpa [#allocation12], 0
    %20 = vsyncpa [#allocation7], 0
    %s21 = scalar_lea.sflag [#allocation7], 1
    %22 = vsyncpa %s21, 0
    loop: start=0, step=1, limit=4
    $region2: #{tpu_custom_call.1} parent=1 // loop_pre_header
      _
    $region3: #{tpu_custom_call.1} parent=1 // loop_header
      %s24 = sphi 0, %s28
      %p25 = scmp.ge.s32.totalorder %s24, 4
      %s34 = sphi 0, %s36
      %s37 = sphi 0, %s34
      %s38 = sphi 0, %s37
      %s54 = sphi 0, %s38
      %s60 = sphi 0, %s62
      %s63 = sphi 0, %s60
      %s64 = sphi 0, %s63
      %s80 = sphi 0, %s64
      %s84 = sphi 0, %s84
      %s86 = sphi 0, %s84
      %s87 = sphi 0, %s86
      %s101 = sphi 0, %s87
      %s105 = sphi 0, %s105
      %s107 = sphi 0, %s105
      %s108 = sphi 0, %s107
      %s122 = sphi 0, %s108
      %s126 = sphi 0, %s126
      %s128 = sphi 0, %s126
      %s129 = sphi 0, %s128
      %s143 = sphi 0, %s129
      %s147 = sphi 0, %s147
      %s149 = sphi 0, %s147
      %s150 = sphi 0, %s149
      %s164 = sphi 0, %s150
      %s168 = sphi 0, %s168
      %s170 = sphi 0, %s168
      %s171 = sphi 0, %s170
      %s185 = sphi 0, %s171
      %s189 = sphi 0, %s189
      %s191 = sphi 0, %s189
      %s192 = sphi 0, %s191
      %s206 = sphi 0, %s192
      %s212 = sphi 0, %s214
      %s215 = sphi 0, %s212
      %s216 = sphi 0, %s215
      %s232 = sphi 0, %s216
    $region4: #{tpu_custom_call.1} parent=1 // loop_header_branch
      %27 = sbr.rel (%p25) target = $region8
    $region5: #{tpu_custom_call.1} parent=1 // loop_body
      %s29 = ssub.s32 %s24, 1
      %s30 = ssub.s32 %s24, 2
      %s31 = sadd.s32 %s24, 1
      %s32 = ssub.s32 %s24, %s31
      %p33 = scmp.eq.s32.totalorder %s32, 0
      %s35 = sadd.s32 %s34, 1
      %s36 = scalar_select %p33, %s34, %s35
      %p39 = pneg %p33
      %p40 = scmp.eq.s32.totalorder %s24, 1
      %p41 = por %p39, %p40
      %p42 = scmp.ne.s32.totalorder %s34, %s37
      %p43 = scmp.eq.s32.totalorder %s24, 0
      %p44 = por %p42, %p43
      %p45 = scmp.ne.s32.totalorder %s34, %s37
      %p46 = scmp.eq.s32.totalorder %s29, 1
      %p47 = por %p45, %p46
      %p48 = scmp.ne.s32.totalorder %s37, %s38
      %p49 = scmp.eq.s32.totalorder %s29, 0
      %p50 = por %p48, %p49
      %p51 = scmp.ne.s32.totalorder %s37, %s38
      %p52 = scmp.eq.s32.totalorder %s30, 1
      %p53 = por %p51, %p52
      %p55 = scmp.ne.s32.totalorder %s38, %s54
      %p56 = scmp.eq.s32.totalorder %s30, 0
      %p57 = por %p55, %p56
      %s58 = ssub.s32 %s24, %s31
      %p59 = scmp.eq.s32.totalorder %s58, 0
      %s61 = sadd.s32 %s60, 1
      %s62 = scalar_select %p59, %s60, %s61
      %p65 = pneg %p59
      %p66 = scmp.eq.s32.totalorder %s24, 1
      %p67 = por %p65, %p66
      %p68 = scmp.ne.s32.totalorder %s60, %s63
      %p69 = scmp.eq.s32.totalorder %s24, 0
      %p70 = por %p68, %p69
      %p71 = scmp.ne.s32.totalorder %s60, %s63
      %p72 = scmp.eq.s32.totalorder %s29, 1
      %p73 = por %p71, %p72
      %p74 = scmp.ne.s32.totalorder %s63, %s64
      %p75 = scmp.eq.s32.totalorder %s29, 0
      %p76 = por %p74, %p75
      %p77 = scmp.ne.s32.totalorder %s63, %s64
      %p78 = scmp.eq.s32.totalorder %s30, 1
      %p79 = por %p77, %p78
      %p81 = scmp.ne.s32.totalorder %s64, %s80
      %p82 = scmp.eq.s32.totalorder %s30, 0
      %p83 = por %p81, %p82
      %s85 = sadd.s32 %s84, 1
      %p88 = scmp.eq.s32.totalorder %s24, 1
      %p89 = scmp.ne.s32.totalorder %s84, %s86
      %p90 = scmp.eq.s32.totalorder %s24, 0
      %p91 = por %p89, %p90
      %p92 = scmp.ne.s32.totalorder %s84, %s86
      %p93 = scmp.eq.s32.totalorder %s29, 1
      %p94 = por %p92, %p93
      %p95 = scmp.ne.s32.totalorder %s86, %s87
      %p96 = scmp.eq.s32.totalorder %s29, 0
      %p97 = por %p95, %p96
      %p98 = scmp.ne.s32.totalorder %s86, %s87
      %p99 = scmp.eq.s32.totalorder %s30, 1
      %p100 = por %p98, %p99
      %p102 = scmp.ne.s32.totalorder %s87, %s101
      %p103 = scmp.eq.s32.totalorder %s30, 0
      %p104 = por %p102, %p103
      %s106 = sadd.s32 %s105, 1
      %p109 = scmp.eq.s32.totalorder %s24, 1
      %p110 = scmp.ne.s32.totalorder %s105, %s107
      %p111 = scmp.eq.s32.totalorder %s24, 0
      %p112 = por %p110, %p111
      %p113 = scmp.ne.s32.totalorder %s105, %s107
      %p114 = scmp.eq.s32.totalorder %s29, 1
      %p115 = por %p113, %p114
      %p116 = scmp.ne.s32.totalorder %s107, %s108
      %p117 = scmp.eq.s32.totalorder %s29, 0
      %p118 = por %p116, %p117
      %p119 = scmp.ne.s32.totalorder %s107, %s108
      %p120 = scmp.eq.s32.totalorder %s30, 1
      %p121 = por %p119, %p120
      %p123 = scmp.ne.s32.totalorder %s108, %s122
      %p124 = scmp.eq.s32.totalorder %s30, 0
      %p125 = por %p123, %p124
      %s127 = sadd.s32 %s126, 1
      %p130 = scmp.eq.s32.totalorder %s24, 1
      %p131 = scmp.ne.s32.totalorder %s126, %s128
      %p132 = scmp.eq.s32.totalorder %s24, 0
      %p133 = por %p131, %p132
      %p134 = scmp.ne.s32.totalorder %s126, %s128
      %p135 = scmp.eq.s32.totalorder %s29, 1
      %p136 = por %p134, %p135
      %p137 = scmp.ne.s32.totalorder %s128, %s129
      %p138 = scmp.eq.s32.totalorder %s29, 0
      %p139 = por %p137, %p138
      %p140 = scmp.ne.s32.totalorder %s128, %s129
      %p141 = scmp.eq.s32.totalorder %s30, 1
      %p142 = por %p140, %p141
      %p144 = scmp.ne.s32.totalorder %s129, %s143
      %p145 = scmp.eq.s32.totalorder %s30, 0
      %p146 = por %p144, %p145
      %s148 = sadd.s32 %s147, 1
      %p151 = scmp.eq.s32.totalorder %s24, 1
      %p152 = scmp.ne.s32.totalorder %s147, %s149
      %p153 = scmp.eq.s32.totalorder %s24, 0
      %p154 = por %p152, %p153
      %p155 = scmp.ne.s32.totalorder %s147, %s149
      %p156 = scmp.eq.s32.totalorder %s29, 1
      %p157 = por %p155, %p156
      %p158 = scmp.ne.s32.totalorder %s149, %s150
      %p159 = scmp.eq.s32.totalorder %s29, 0
      %p160 = por %p158, %p159
      %p161 = scmp.ne.s32.totalorder %s149, %s150
      %p162 = scmp.eq.s32.totalorder %s30, 1
      %p163 = por %p161, %p162
      %p165 = scmp.ne.s32.totalorder %s150, %s164
      %p166 = scmp.eq.s32.totalorder %s30, 0
      %p167 = por %p165, %p166
      %s169 = sadd.s32 %s168, 1
      %p172 = scmp.eq.s32.totalorder %s24, 1
      %p173 = scmp.ne.s32.totalorder %s168, %s170
      %p174 = scmp.eq.s32.totalorder %s24, 0
      %p175 = por %p173, %p174
      %p176 = scmp.ne.s32.totalorder %s168, %s170
      %p177 = scmp.eq.s32.totalorder %s29, 1
      %p178 = por %p176, %p177
      %p179 = scmp.ne.s32.totalorder %s170, %s171
      %p180 = scmp.eq.s32.totalorder %s29, 0
      %p181 = por %p179, %p180
      %p182 = scmp.ne.s32.totalorder %s170, %s171
      %p183 = scmp.eq.s32.totalorder %s30, 1
      %p184 = por %p182, %p183
      %p186 = scmp.ne.s32.totalorder %s171, %s185
      %p187 = scmp.eq.s32.totalorder %s30, 0
      %p188 = por %p186, %p187
      %s190 = sadd.s32 %s189, 1
      %p193 = scmp.eq.s32.totalorder %s24, 1
      %p194 = scmp.ne.s32.totalorder %s189, %s191
      %p195 = scmp.eq.s32.totalorder %s24, 0
      %p196 = por %p194, %p195
      %p197 = scmp.ne.s32.totalorder %s189, %s191
      %p198 = scmp.eq.s32.totalorder %s29, 1
      %p199 = por %p197, %p198
      %p200 = scmp.ne.s32.totalorder %s191, %s192
      %p201 = scmp.eq.s32.totalorder %s29, 0
      %p202 = por %p200, %p201
      %p203 = scmp.ne.s32.totalorder %s191, %s192
      %p204 = scmp.eq.s32.totalorder %s30, 1
      %p205 = por %p203, %p204
      %p207 = scmp.ne.s32.totalorder %s192, %s206
      %p208 = scmp.eq.s32.totalorder %s30, 0
      %p209 = por %p207, %p208
      %s210 = ssub.s32 %s24, %s31
      %p211 = scmp.eq.s32.totalorder %s210, 0
      %s213 = sadd.s32 %s212, 1
      %s214 = scalar_select %p211, %s212, %s213
      %p217 = pneg %p211
      %p218 = scmp.eq.s32.totalorder %s24, 1
      %p219 = por %p217, %p218
      %p220 = scmp.ne.s32.totalorder %s212, %s215
      %p221 = scmp.eq.s32.totalorder %s24, 0
      %p222 = por %p220, %p221
      %p223 = scmp.ne.s32.totalorder %s212, %s215
      %p224 = scmp.eq.s32.totalorder %s29, 1
      %p225 = por %p223, %p224
      %p226 = scmp.ne.s32.totalorder %s215, %s216
      %p227 = scmp.eq.s32.totalorder %s29, 0
      %p228 = por %p226, %p227
      %p229 = scmp.ne.s32.totalorder %s215, %s216
      %p230 = scmp.eq.s32.totalorder %s30, 1
      %p231 = por %p229, %p230
      %p233 = scmp.ne.s32.totalorder %s216, %s232
      %p234 = scmp.eq.s32.totalorder %s30, 0
      %p235 = por %p233, %p234
      %p236 = scmp.le.s32.totalorder 1, %s24
      %p237 = scmp.lt.s32.totalorder %s24, 3
      %p238 = pnand %p236, %p237
      %p239 = pneg %p238
      // Predicated region
      $region9: #{tpu_custom_call.1} parent=5 // pred_check
        _
      $region10: #{tpu_custom_call.1} parent=5 // pred_check_branch
        %241 = sbr.rel (%p238) target = $region12
      $region11: #{tpu_custom_call.1} parent=5 // pred_region
        %s242 = ssub.s32 %s24, 1
        // Predicated region
        $region13: #{tpu_custom_call.1} parent=11 // pred_check
          %p243 = pneg %p97
        $region14: #{tpu_custom_call.1} parent=11 // pred_check_branch
          %245 = sbr.rel (%p243) target = $region16
        $region15: #{tpu_custom_call.1} parent=11 // pred_region
          %247 = vsyncadd [#allocation9], 0
          %s248 = sshll.u32 %s2, 4
          %s249 = int_to_ptr.hbm [resolvable:$true] %s248
          %s250 = sshll.u32 [#allocation10], 4
          %s251 = int_to_ptr.vmem [resolvable:$true] %s250
          %256 = dma.hbm_to_vmem [thread:$0]  %s249, 18432, %s251, [#allocation9], 128, 128, 8
        $region16: #{tpu_custom_call.1} parent=11 // pred_fallthru
          _
        // Predicated region
        $region17: #{tpu_custom_call.1} parent=11 // pred_check
          %p257 = pneg %p118
        $region18: #{tpu_custom_call.1} parent=11 // pred_check_branch
          %259 = sbr.rel (%p257) target = $region20
        $region19: #{tpu_custom_call.1} parent=11 // pred_region
          _
        $region20: #{tpu_custom_call.1} parent=11 // pred_fallthru
          _
        // Predicated region
        $region21: #{tpu_custom_call.1} parent=11 // pred_check
          %p260 = pneg %p139
        $region22: #{tpu_custom_call.1} parent=11 // pred_check_branch
          %262 = sbr.rel (%p260) target = $region24
        $region23: #{tpu_custom_call.1} parent=11 // pred_region
          %264 = vsyncadd [#allocation12], 0
          %s265 = sshll.u32 %s4, 4
          %s266 = int_to_ptr.hbm [resolvable:$true] %s265
          %s267 = sshll.u32 [#allocation11], 4
          %s268 = int_to_ptr.vmem [resolvable:$true] %s267
          %273 = dma.hbm_to_vmem [thread:$0]  %s266, 18432, %s268, [#allocation12], 128, 128, 8
        $region24: #{tpu_custom_call.1} parent=11 // pred_fallthru
          _
        // Predicated region
        $region25: #{tpu_custom_call.1} parent=11 // pred_check
          %p274 = pneg %p160
        $region26: #{tpu_custom_call.1} parent=11 // pred_check_branch
          %276 = sbr.rel (%p274) target = $region28
        $region27: #{tpu_custom_call.1} parent=11 // pred_region
          _
        $region28: #{tpu_custom_call.1} parent=11 // pred_fallthru
          _
        // Predicated region
        $region29: #{tpu_custom_call.1} parent=11 // pred_check
          %p277 = pneg %p181
        $region30: #{tpu_custom_call.1} parent=11 // pred_check_branch
          %279 = sbr.rel (%p277) target = $region32
        $region31: #{tpu_custom_call.1} parent=11 // pred_region
          %281 = vsyncadd [#allocation12], 0
          %s282 = sshll.u32 %s6, 4
          %s283 = int_to_ptr.hbm [resolvable:$true] %s282
          %s284 = sshll.u32 [#allocation13], 4
          %s285 = int_to_ptr.vmem [resolvable:$true] %s284
          %290 = dma.hbm_to_vmem [thread:$0]  %s283, 8192, %s285, [#allocation12], 512, 512, 32
        $region32: #{tpu_custom_call.1} parent=11 // pred_fallthru
          _
        // Predicated region
        $region33: #{tpu_custom_call.1} parent=11 // pred_check
          %p291 = pneg %p202
        $region34: #{tpu_custom_call.1} parent=11 // pred_check_branch
          %293 = sbr.rel (%p291) target = $region36
        $region35: #{tpu_custom_call.1} parent=11 // pred_region
          _
        $region36: #{tpu_custom_call.1} parent=11 // pred_fallthru
          _
      $region12: #{tpu_custom_call.1} parent=5 // pred_fallthru
        _
      %p294 = scmp.lt.s32.totalorder %s24, 2
      // Predicated region
      $region37: #{tpu_custom_call.1} parent=5 // pred_check
        %p295 = pneg %p294
      $region38: #{tpu_custom_call.1} parent=5 // pred_check_branch
        %297 = sbr.rel (%p295) target = $region40
      $region39: #{tpu_custom_call.1} parent=5 // pred_region
        // Predicated region
        $region41: #{tpu_custom_call.1} parent=39 // pred_check
          %p298 = pneg %p44
        $region42: #{tpu_custom_call.1} parent=39 // pred_check_branch
          %300 = sbr.rel (%p298) target = $region44
        $region43: #{tpu_custom_call.1} parent=39 // pred_region
          %s301 = sand.u32 %s34, 1
          %s302 = scalar_lea.sflag [#allocation6], %s301
          %s303 = sand.u32 %s34, 1
          %s304 = smul.addr %s303, 64
          %s305 = scalar_lea.vmem [#allocation5], %s304
          %307 = vsyncadd %s302, 0
          %s308 = smul.addr %s24, 8
          %s309 = smul.addr %s308, 8
          %s310 = scalar_lea.hbm %s0, %s309
          %s311 = sshll.u32 %s310, 4
          %s312 = int_to_ptr.hbm [resolvable:$true] %s311
          %s313 = sshll.u32 %s305, 4
          %s314 = int_to_ptr.vmem [resolvable:$true] %s313
          %319 = dma.hbm_to_vmem [thread:$0]  %s312, 1024, %s314, %s302, 128, 128, 8
        $region44: #{tpu_custom_call.1} parent=39 // pred_fallthru
          _
        // Predicated region
        $region45: #{tpu_custom_call.1} parent=39 // pred_check
          %p320 = pneg %p70
        $region46: #{tpu_custom_call.1} parent=39 // pred_check_branch
          %322 = sbr.rel (%p320) target = $region48
        $region47: #{tpu_custom_call.1} parent=39 // pred_region
          %s323 = sand.u32 %s24, 1
          %s324 = scalar_lea.sflag [#allocation9], %s323
          %s325 = sand.u32 %s60, 1
          %s326 = smul.addr %s325, 16
          %s327 = scalar_lea.vmem [#allocation8], %s326
          %329 = vsyncadd %s324, 0
          %s330 = smul.addr %s24, 4
          %s331 = smul.addr %s330, 4
          %s332 = scalar_lea.hbm %s1, %s331
          %s333 = sshll.u32 %s332, 4
          %s334 = int_to_ptr.hbm [resolvable:$true] %s333
          %s335 = sshll.u32 %s327, 4
          %s336 = int_to_ptr.vmem [resolvable:$true] %s335
          %341 = dma.hbm_to_vmem [thread:$0]  %s334, 256, %s336, %s324, 64, 64, 4
        $region48: #{tpu_custom_call.1} parent=39 // pred_fallthru
          _
      $region40: #{tpu_custom_call.1} parent=5 // pred_fallthru
        _
      %p342 = scmp.le.s32.totalorder 1, %s24
      %p343 = scmp.lt.s32.totalorder %s24, 3
      %p344 = pnand %p342, %p343
      %p345 = pneg %p344
      // Predicated region
      $region49: #{tpu_custom_call.1} parent=5 // pred_check
        _
      $region50: #{tpu_custom_call.1} parent=5 // pred_check_branch
        %347 = sbr.rel (%p344) target = $region52
      $region51: #{tpu_custom_call.1} parent=5 // pred_region
        %s348 = ssub.s32 %s24, 1
        %s349 = sand.u32 %s37, 1
        %s350 = scalar_lea.sflag [#allocation6], %s349
        %s351 = sand.u32 %s37, 1
        %s352 = smul.addr %s351, 64
        %s353 = scalar_lea.vmem [#allocation5], %s352
        // Predicated region
        $region53: #{tpu_custom_call.1} parent=51 // pred_check
          %p354 = pneg %p50
        $region54: #{tpu_custom_call.1} parent=51 // pred_check_branch
          %356 = sbr.rel (%p354) target = $region56
        $region55: #{tpu_custom_call.1} parent=51 // pred_region
          %358 = dma.done %s350, 1024
        $region56: #{tpu_custom_call.1} parent=51 // pred_fallthru
          _
        %s359 = sand.u32 %s29, 1
        %s360 = scalar_lea.sflag [#allocation9], %s359
        %s361 = sand.u32 %s63, 1
        %s362 = smul.addr %s361, 16
        %s363 = scalar_lea.vmem [#allocation8], %s362
        // Predicated region
        $region57: #{tpu_custom_call.1} parent=51 // pred_check
          %p364 = pneg %p76
        $region58: #{tpu_custom_call.1} parent=51 // pred_check_branch
          %366 = sbr.rel (%p364) target = $region60
        $region59: #{tpu_custom_call.1} parent=51 // pred_region
          %368 = dma.done %s360, 256
        $region60: #{tpu_custom_call.1} parent=51 // pred_fallthru
          _
        // Predicated region
        $region61: #{tpu_custom_call.1} parent=51 // pred_check
          %p369 = pneg %p97
        $region62: #{tpu_custom_call.1} parent=51 // pred_check_branch
          %371 = sbr.rel (%p369) target = $region64
        $region63: #{tpu_custom_call.1} parent=51 // pred_region
          %373 = dma.done [#allocation9], 18432
        $region64: #{tpu_custom_call.1} parent=51 // pred_fallthru
          _
        // Predicated region
        $region65: #{tpu_custom_call.1} parent=51 // pred_check
          %p374 = pneg %p139
        $region66: #{tpu_custom_call.1} parent=51 // pred_check_branch
          %376 = sbr.rel (%p374) target = $region68
        $region67: #{tpu_custom_call.1} parent=51 // pred_region
          %378 = dma.done [#allocation12], 18432
        $region68: #{tpu_custom_call.1} parent=51 // pred_fallthru
          _
        // Predicated region
        $region69: #{tpu_custom_call.1} parent=51 // pred_check
          %p379 = pneg %p181
        $region70: #{tpu_custom_call.1} parent=51 // pred_check_branch
          %381 = sbr.rel (%p379) target = $region72
        $region71: #{tpu_custom_call.1} parent=51 // pred_region
          %383 = dma.done [#allocation12], 8192
        $region72: #{tpu_custom_call.1} parent=51 // pred_fallthru
          _
        %s384 = sand.u32 %s37, 1
        %s385 = scalar_lea.sflag [#allocation6], %s384
        %s386 = sand.u32 %s37, 1
        %s387 = smul.addr %s386, 64
        %s388 = scalar_lea.vmem [#allocation5], %s387
        %p389 = pneg %p50
        %p390 = pneg %p47
        %s391 = sand.u32 %s29, 1
        %s392 = scalar_lea.sflag [#allocation9], %s391
        %s393 = sand.u32 %s63, 1
        %s394 = smul.addr %s393, 16
        %s395 = scalar_lea.vmem [#allocation8], %s394
        %p396 = pneg %p76
        %p397 = pneg %p73
        %p398 = pneg %p97
        %p399 = pneg %p94
        %p400 = pneg %p118
        %p401 = pneg %p115
        %p402 = pneg %p139
        %p403 = pneg %p136
        %p404 = pneg %p160
        %p405 = pneg %p157
        %p406 = pneg %p181
        %p407 = pneg %p178
        %p408 = pneg %p202
        %p409 = pneg %p199
        %p410 = pneg %p228
        %p411 = pneg %p225
        %s412 = sand.u32 %s215, 1
        %s413 = scalar_lea.sflag [#allocation7], %s412
        %s414 = sand.u32 %s215, 1
        %s415 = smul.addr %s414, 64
        %s416 = scalar_lea.vmem [#allocation14], %s415
        %s417 = smul.u32 4, %s29
        %418 = vst [vmem:[#allocation2] sm:$0xff] 0.0
        %419 = vst [vmem:[#allocation2 + $0x8] sm:$0x3] 0.0
        %420 = vst [vmem:[#allocation2 + $0x10] sm:$0xff] 0.0
        %421 = vst [vmem:[#allocation2 + $0x18] sm:$0x3] 0.0
        %422 = vst [vmem:[#allocation2 + $0x20] sm:$0xff] 0.0
        %423 = vst [vmem:[#allocation2 + $0x28] sm:$0x3] 0.0
        %424 = vst [vmem:[#allocation2 + $0x30] sm:$0xff] 0.0
        %425 = vst [vmem:[#allocation2 + $0x38] sm:$0x3] 0.0
        %426 = vst [vmem:[#allocation2 + $0x40] sm:$0xff] 0.0
        %427 = vst [vmem:[#allocation2 + $0x48] sm:$0x3] 0.0
        %428 = vst [vmem:[#allocation2 + $0x50] sm:$0xff] 0.0
        %429 = vst [vmem:[#allocation2 + $0x58] sm:$0x3] 0.0
        %430 = vst [vmem:[#allocation2 + $0x60] sm:$0xff] 0.0
        %431 = vst [vmem:[#allocation2 + $0x68] sm:$0x3] 0.0
        %432 = vst [vmem:[#allocation2 + $0x70] sm:$0xff] 0.0
        %433 = vst [vmem:[#allocation2 + $0x78] sm:$0x3] 0.0
        %434 = vst [vmem:[#allocation2 + $0x80] sm:$0xff] 0.0
        %435 = vst [vmem:[#allocation2 + $0x88] sm:$0x3] 0.0
        %436 = vst [vmem:[#allocation2 + $0x90] sm:$0xff] 0.0
        %437 = vst [vmem:[#allocation2 + $0x98] sm:$0x3] 0.0
        %v438 = vld [vmem:[%s353] sm:$0xff]
        %v439 = vld [vmem:[%s353 + $0x8] sm:$0xff]
        %v440 = vld [vmem:[%s353 + $0x10] sm:$0xff]
        %v441 = vld [vmem:[%s353 + $0x18] sm:$0xff]
        %v442 = vld [vmem:[%s353 + $0x20] sm:$0xff]
        %v443 = vld [vmem:[%s353 + $0x28] sm:$0xff]
        %v444 = vld [vmem:[%s353 + $0x30] sm:$0xff]
        %v445 = vld [vmem:[%s353 + $0x38] sm:$0xff]
        %s446 = scalar_lea.vmem [#allocation2], 16
        %447 = vst [vmem:[%s446 + $0x1] sm:$0xff] %v438
        %448 = vst [vmem:[%s446 + $0x11] sm:$0xff] %v439
        %449 = vst [vmem:[%s446 + $0x21] sm:$0xff] %v440
        %450 = vst [vmem:[%s446 + $0x31] sm:$0xff] %v441
        %451 = vst [vmem:[%s446 + $0x41] sm:$0xff] %v442
        %452 = vst [vmem:[%s446 + $0x51] sm:$0xff] %v443
        %453 = vst [vmem:[%s446 + $0x61] sm:$0xff] %v444
        %454 = vst [vmem:[%s446 + $0x71] sm:$0xff] %v445
        %455 = vst [vmem:[#allocation3] sm:$0x3f] 0.0
        %456 = vst [vmem:[#allocation3 + $0x8] sm:$0x3f] 0.0
        %457 = vst [vmem:[#allocation3 + $0x10] sm:$0x3f] 0.0
        %458 = vst [vmem:[#allocation3 + $0x18] sm:$0x3f] 0.0
        %459 = vst [vmem:[#allocation3 + $0x20] sm:$0x3f] 0.0
        %460 = vst [vmem:[#allocation3 + $0x28] sm:$0x3f] 0.0
        %v461 = vld [vmem:[%s363] sm:$0xf]
        %v462 = vld [vmem:[%s363 + $0x4] sm:$0xf]
        %v463 = vld [vmem:[%s363 + $0x8] sm:$0xf]
        %v464 = vld [vmem:[%s363 + $0xc] sm:$0xf]
        %s465 = scalar_lea.vmem [#allocation3], 8
        %466 = vst [vmem:[%s465 + $0x1] sm:$0xf] %v461
        %467 = vst [vmem:[%s465 + $0x9] sm:$0xf] %v462
        %468 = vst [vmem:[%s465 + $0x11] sm:$0xf] %v463
        %469 = vst [vmem:[%s465 + $0x19] sm:$0xf] %v464
        %v470 = vld [vmem:[#allocation3] sm:$0xf]
        %v471 = vld [vmem:[#allocation3 + $0x8] sm:$0xf]
        %v472 = vld [vmem:[#allocation3 + $0x10] sm:$0xf]
        %v473 = vld [vmem:[#allocation3 + $0x18] sm:$0xf]
        %v474 = vld [vmem:[#allocation3 + $0x20] sm:$0xf]
        %v475 = vld [vmem:[#allocation3 + $0x28] sm:$0xf]
        %480 = vst [vmem:[#allocation1] ss:$2 sm:$0xff] %v470
        %s481 = scalar_lea.vmem [#allocation1], 1
        %482 = vst [vmem:[%s481] ss:$2 sm:$0xff] %v471
        %s483 = scalar_lea.vmem [#allocation1], 16
        %484 = vst [vmem:[%s483] ss:$2 sm:$0xff] %v472
        %s485 = scalar_lea.vmem [#allocation1], 17
        %486 = vst [vmem:[%s485] ss:$2 sm:$0xff] %v473
        %v487 = vld.sshfl [vmem:[#allocation1] sm:$0xff pattern:$0x75316420]
        %v488 = vld.sshfl [vmem:[#allocation1 + $0x10] sm:$0xff pattern:$0x75316420]
        %491 = vst [vmem:[#allocation4] sm:$0xff] %v487
        %492 = vst [vmem:[#allocation4 + $0x48] sm:$0xff] %v488
        %494 = vst [vmem:[#allocation1] ss:$2 sm:$0xff] %v471
        %s495 = scalar_lea.vmem [#allocation1], 1
        %496 = vst [vmem:[%s495] ss:$2 sm:$0xff] %v472
        %s497 = scalar_lea.vmem [#allocation1], 16
        %498 = vst [vmem:[%s497] ss:$2 sm:$0xff] %v473
        %s499 = scalar_lea.vmem [#allocation1], 17
        %500 = vst [vmem:[%s499] ss:$2 sm:$0xff] %v474
        %v501 = vld.sshfl [vmem:[#allocation1] sm:$0xff pattern:$0x75316420]
        %v502 = vld.sshfl [vmem:[#allocation1 + $0x10] sm:$0xff pattern:$0x75316420]
        %505 = vst [vmem:[#allocation4 + $0x8] sm:$0xff] %v501
        %506 = vst [vmem:[#allocation4 + $0x50] sm:$0xff] %v502
        %508 = vst [vmem:[#allocation1] ss:$2 sm:$0xff] %v472
        %s509 = scalar_lea.vmem [#allocation1], 1
        %510 = vst [vmem:[%s509] ss:$2 sm:$0xff] %v473
        %s511 = scalar_lea.vmem [#allocation1], 16
        %512 = vst [vmem:[%s511] ss:$2 sm:$0xff] %v474
        %s513 = scalar_lea.vmem [#allocation1], 17
        %514 = vst [vmem:[%s513] ss:$2 sm:$0xff] %v475
        %v515 = vld.sshfl [vmem:[#allocation1] sm:$0xff pattern:$0x75316420]
        %v516 = vld.sshfl [vmem:[#allocation1 + $0x10] sm:$0xff pattern:$0x75316420]
        %519 = vst [vmem:[#allocation4 + $0x10] sm:$0xff] %v515
        %520 = vst [vmem:[#allocation4 + $0x58] sm:$0xff] %v516
        %v521 = vld [vmem:[#allocation3 + $0x1] sm:$0xf]
        %v522 = vld [vmem:[#allocation3 + $0x9] sm:$0xf]
        %v523 = vld [vmem:[#allocation3 + $0x11] sm:$0xf]
        %v524 = vld [vmem:[#allocation3 + $0x19] sm:$0xf]
        %v525 = vld [vmem:[#allocation3 + $0x21] sm:$0xf]
        %v526 = vld [vmem:[#allocation3 + $0x29] sm:$0xf]
        %531 = vst [vmem:[#allocation1] ss:$2 sm:$0xff] %v521
        %s532 = scalar_lea.vmem [#allocation1], 1
        %533 = vst [vmem:[%s532] ss:$2 sm:$0xff] %v522
        %s534 = scalar_lea.vmem [#allocation1], 16
        %535 = vst [vmem:[%s534] ss:$2 sm:$0xff] %v523
        %s536 = scalar_lea.vmem [#allocation1], 17
        %537 = vst [vmem:[%s536] ss:$2 sm:$0xff] %v524
        %v538 = vld.sshfl [vmem:[#allocation1] sm:$0xff pattern:$0x75316420]
        %v539 = vld.sshfl [vmem:[#allocation1 + $0x10] sm:$0xff pattern:$0x75316420]
        %542 = vst [vmem:[#allocation4 + $0x18] sm:$0xff] %v538
        %543 = vst [vmem:[#allocation4 + $0x60] sm:$0xff] %v539
        %545 = vst [vmem:[#allocation1] ss:$2 sm:$0xff] %v522
        %s546 = scalar_lea.vmem [#allocation1], 1
        %547 = vst [vmem:[%s546] ss:$2 sm:$0xff] %v523
        %s548 = scalar_lea.vmem [#allocation1], 16
        %549 = vst [vmem:[%s548] ss:$2 sm:$0xff] %v524
        %s550 = scalar_lea.vmem [#allocation1], 17
        %551 = vst [vmem:[%s550] ss:$2 sm:$0xff] %v525
        %v552 = vld.sshfl [vmem:[#allocation1] sm:$0xff pattern:$0x75316420]
        %v553 = vld.sshfl [vmem:[#allocation1 + $0x10] sm:$0xff pattern:$0x75316420]
        %556 = vst [vmem:[#allocation4 + $0x20] sm:$0xff] %v552
        %557 = vst [vmem:[#allocation4 + $0x68] sm:$0xff] %v553
        %559 = vst [vmem:[#allocation1] ss:$2 sm:$0xff] %v523
        %s560 = scalar_lea.vmem [#allocation1], 1
        %561 = vst [vmem:[%s560] ss:$2 sm:$0xff] %v524
        %s562 = scalar_lea.vmem [#allocation1], 16
        %563 = vst [vmem:[%s562] ss:$2 sm:$0xff] %v525
        %s564 = scalar_lea.vmem [#allocation1], 17
        %565 = vst [vmem:[%s564] ss:$2 sm:$0xff] %v526
        %v566 = vld.sshfl [vmem:[#allocation1] sm:$0xff pattern:$0x75316420]
        %v567 = vld.sshfl [vmem:[#allocation1 + $0x10] sm:$0xff pattern:$0x75316420]
        %570 = vst [vmem:[#allocation4 + $0x28] sm:$0xff] %v566
        %571 = vst [vmem:[#allocation4 + $0x70] sm:$0xff] %v567
        %v572 = vld [vmem:[#allocation3 + $0x2] sm:$0xf]
        %v573 = vld [vmem:[#allocation3 + $0xa] sm:$0xf]
        %v574 = vld [vmem:[#allocation3 + $0x12] sm:$0xf]
        %v575 = vld [vmem:[#allocation3 + $0x1a] sm:$0xf]
        %v576 = vld [vmem:[#allocation3 + $0x22] sm:$0xf]
        %v577 = vld [vmem:[#allocation3 + $0x2a] sm:$0xf]
        %582 = vst [vmem:[#allocation1] ss:$2 sm:$0xff] %v572
        %s583 = scalar_lea.vmem [#allocation1], 1
        %584 = vst [vmem:[%s583] ss:$2 sm:$0xff] %v573
        %s585 = scalar_lea.vmem [#allocation1], 16
        %586 = vst [vmem:[%s585] ss:$2 sm:$0xff] %v574
        %s587 = scalar_lea.vmem [#allocation1], 17
        %588 = vst [vmem:[%s587] ss:$2 sm:$0xff] %v575
        %v589 = vld.sshfl [vmem:[#allocation1] sm:$0xff pattern:$0x75316420]
        %v590 = vld.sshfl [vmem:[#allocation1 + $0x10] sm:$0xff pattern:$0x75316420]
        %593 = vst [vmem:[#allocation4 + $0x30] sm:$0xff] %v589
        %594 = vst [vmem:[#allocation4 + $0x78] sm:$0xff] %v590
        %596 = vst [vmem:[#allocation1] ss:$2 sm:$0xff] %v573
        %s597 = scalar_lea.vmem [#allocation1], 1
        %598 = vst [vmem:[%s597] ss:$2 sm:$0xff] %v574
        %s599 = scalar_lea.vmem [#allocation1], 16
        %600 = vst [vmem:[%s599] ss:$2 sm:$0xff] %v575
        %s601 = scalar_lea.vmem [#allocation1], 17
        %602 = vst [vmem:[%s601] ss:$2 sm:$0xff] %v576
        %v603 = vld.sshfl [vmem:[#allocation1] sm:$0xff pattern:$0x75316420]
        %v604 = vld.sshfl [vmem:[#allocation1 + $0x10] sm:$0xff pattern:$0x75316420]
        %607 = vst [vmem:[#allocation4 + $0x38] sm:$0xff] %v603
        %608 = vst [vmem:[#allocation4 + $0x80] sm:$0xff] %v604
        %610 = vst [vmem:[#allocation1] ss:$2 sm:$0xff] %v574
        %s611 = scalar_lea.vmem [#allocation1], 1
        %612 = vst [vmem:[%s611] ss:$2 sm:$0xff] %v575
        %s613 = scalar_lea.vmem [#allocation1], 16
        %614 = vst [vmem:[%s613] ss:$2 sm:$0xff] %v576
        %s615 = scalar_lea.vmem [#allocation1], 17
        %616 = vst [vmem:[%s615] ss:$2 sm:$0xff] %v577
        %v617 = vld.sshfl [vmem:[#allocation1] sm:$0xff pattern:$0x75316420]
        %v618 = vld.sshfl [vmem:[#allocation1 + $0x10] sm:$0xff pattern:$0x75316420]
        %621 = vst [vmem:[#allocation4 + $0x40] sm:$0xff] %v617
        %622 = vst [vmem:[#allocation4 + $0x88] sm:$0xff] %v618
        %v623 = vld [vmem:[#allocation4] sm:$0xff]
        %v624 = vld [vmem:[#allocation4 + $0x8] sm:$0xff]
        %v625 = vld [vmem:[#allocation4 + $0x10] sm:$0xff]
        %v626 = vld [vmem:[#allocation4 + $0x18] sm:$0xff]
        %v627 = vld [vmem:[#allocation4 + $0x20] sm:$0xff]
        %v628 = vld [vmem:[#allocation4 + $0x28] sm:$0xff]
        %v629 = vld [vmem:[#allocation4 + $0x30] sm:$0xff]
        %v630 = vld [vmem:[#allocation4 + $0x38] sm:$0xff]
        %v631 = vld [vmem:[#allocation4 + $0x40] sm:$0xff]
        %v632 = vld [vmem:[#allocation4 + $0x48] sm:$0xff]
        %v633 = vld [vmem:[#allocation4 + $0x50] sm:$0xff]
        %v634 = vld [vmem:[#allocation4 + $0x58] sm:$0xff]
        %v635 = vld [vmem:[#allocation4 + $0x60] sm:$0xff]
        %v636 = vld [vmem:[#allocation4 + $0x68] sm:$0xff]
        %v637 = vld [vmem:[#allocation4 + $0x70] sm:$0xff]
        %v638 = vld [vmem:[#allocation4 + $0x78] sm:$0xff]
        %v639 = vld [vmem:[#allocation4 + $0x80] sm:$0xff]
        %v640 = vld [vmem:[#allocation4 + $0x88] sm:$0xff]
        %v641 = vld [vmem:[#allocation11] sm:$0xff]
        %v642 = vld [vmem:[#allocation11 + $0x8] sm:$0xff]
        %v643 = vld [vmem:[#allocation11 + $0x10] sm:$0xff]
        %v644 = vld [vmem:[#allocation11 + $0x18] sm:$0xff]
        %v645 = vld [vmem:[#allocation11 + $0x20] sm:$0xff]
        %v646 = vld [vmem:[#allocation11 + $0x28] sm:$0xff]
        %v647 = vld [vmem:[#allocation11 + $0x30] sm:$0xff]
        %v648 = vld [vmem:[#allocation11 + $0x38] sm:$0xff]
        %v649 = vld [vmem:[#allocation11 + $0x40] sm:$0xff]
        %v650 = vld [vmem:[#allocation11 + $0x48] sm:$0xff]
        %v651 = vld [vmem:[#allocation11 + $0x50] sm:$0xff]
        %v652 = vld [vmem:[#allocation11 + $0x58] sm:$0xff]
        %v653 = vld [vmem:[#allocation11 + $0x60] sm:$0xff]
        %v654 = vld [vmem:[#allocation11 + $0x68] sm:$0xff]
        %v655 = vld [vmem:[#allocation11 + $0x70] sm:$0xff]
        %v656 = vld [vmem:[#allocation11 + $0x78] sm:$0xff]
        %v657 = vld [vmem:[#allocation11 + $0x80] sm:$0xff]
        %v658 = vld [vmem:[#allocation11 + $0x88] sm:$0xff]
        %v659 = vld [vmem:[#allocation11 + $0x90] sm:$0xff]
        %v660 = vld [vmem:[#allocation11 + $0x98] sm:$0xff]
        %v661 = vld [vmem:[#allocation11 + $0xa0] sm:$0xff]
        %v662 = vld [vmem:[#allocation11 + $0xa8] sm:$0xff]
        %v663 = vld [vmem:[#allocation11 + $0xb0] sm:$0xff]
        %v664 = vld [vmem:[#allocation11 + $0xb8] sm:$0xff]
        %v665 = vld [vmem:[#allocation11 + $0xc0] sm:$0xff]
        %v666 = vld [vmem:[#allocation11 + $0xc8] sm:$0xff]
        %v667 = vld [vmem:[#allocation11 + $0xd0] sm:$0xff]
        %v668 = vld [vmem:[#allocation11 + $0xd8] sm:$0xff]
        %v669 = vld [vmem:[#allocation11 + $0xe0] sm:$0xff]
        %v670 = vld [vmem:[#allocation11 + $0xe8] sm:$0xff]
        %v671 = vld [vmem:[#allocation11 + $0xf0] sm:$0xff]
        %v672 = vld [vmem:[#allocation11 + $0xf8] sm:$0xff]
        %v673 = vld [vmem:[#allocation11 + $0x100] sm:$0xff]
        %v674 = vld [vmem:[#allocation11 + $0x108] sm:$0xff]
        %v675 = vld [vmem:[#allocation11 + $0x110] sm:$0xff]
        %v676 = vld [vmem:[#allocation11 + $0x118] sm:$0xff]
        %v677 = vld [vmem:[#allocation11 + $0x120] sm:$0xff]
        %v678 = vld [vmem:[#allocation11 + $0x128] sm:$0xff]
        %v679 = vld [vmem:[#allocation11 + $0x130] sm:$0xff]
        %v680 = vld [vmem:[#allocation11 + $0x138] sm:$0xff]
        %v681 = vld [vmem:[#allocation11 + $0x140] sm:$0xff]
        %v682 = vld [vmem:[#allocation11 + $0x148] sm:$0xff]
        %v683 = vld [vmem:[#allocation11 + $0x150] sm:$0xff]
        %v684 = vld [vmem:[#allocation11 + $0x158] sm:$0xff]
        %v685 = vld [vmem:[#allocation11 + $0x160] sm:$0xff]
        %v686 = vld [vmem:[#allocation11 + $0x168] sm:$0xff]
        %v687 = vld [vmem:[#allocation11 + $0x170] sm:$0xff]
        %v688 = vld [vmem:[#allocation11 + $0x178] sm:$0xff]
        %v689 = vld [vmem:[#allocation11 + $0x180] sm:$0xff]
        %v690 = vld [vmem:[#allocation11 + $0x188] sm:$0xff]
        %v691 = vld [vmem:[#allocation11 + $0x190] sm:$0xff]
        %v692 = vld [vmem:[#allocation11 + $0x198] sm:$0xff]
        %v693 = vld [vmem:[#allocation11 + $0x1a0] sm:$0xff]
        %v694 = vld [vmem:[#allocation11 + $0x1a8] sm:$0xff]
        %v695 = vld [vmem:[#allocation11 + $0x1b0] sm:$0xff]
        %v696 = vld [vmem:[#allocation11 + $0x1b8] sm:$0xff]
        %v697 = vld [vmem:[#allocation11 + $0x1c0] sm:$0xff]
        %v698 = vld [vmem:[#allocation11 + $0x1c8] sm:$0xff]
        %v699 = vld [vmem:[#allocation11 + $0x1d0] sm:$0xff]
        %v700 = vld [vmem:[#allocation11 + $0x1d8] sm:$0xff]
        %v701 = vld [vmem:[#allocation11 + $0x1e0] sm:$0xff]
        %v702 = vld [vmem:[#allocation11 + $0x1e8] sm:$0xff]
        %v703 = vld [vmem:[#allocation11 + $0x1f0] sm:$0xff]
        %v704 = vld [vmem:[#allocation11 + $0x1f8] sm:$0xff]
        %v705 = vld [vmem:[#allocation11 + $0x200] sm:$0xff]
        %v706 = vld [vmem:[#allocation11 + $0x208] sm:$0xff]
        %v707 = vld [vmem:[#allocation11 + $0x210] sm:$0xff]
        %v708 = vld [vmem:[#allocation11 + $0x218] sm:$0xff]
        %v709 = vld [vmem:[#allocation11 + $0x220] sm:$0xff]
        %v710 = vld [vmem:[#allocation11 + $0x228] sm:$0xff]
        %v711 = vld [vmem:[#allocation11 + $0x230] sm:$0xff]
        %v712 = vld [vmem:[#allocation11 + $0x238] sm:$0xff]
        %v713 = vld [vmem:[#allocation11 + $0x240] sm:$0xff]
        %v714 = vld [vmem:[#allocation11 + $0x248] sm:$0xff]
        %v715 = vld [vmem:[#allocation11 + $0x250] sm:$0xff]
        %v716 = vld [vmem:[#allocation11 + $0x258] sm:$0xff]
        %v717 = vld [vmem:[#allocation11 + $0x260] sm:$0xff]
        %v718 = vld [vmem:[#allocation11 + $0x268] sm:$0xff]
        %v719 = vld [vmem:[#allocation11 + $0x270] sm:$0xff]
        %v720 = vld [vmem:[#allocation11 + $0x278] sm:$0xff]
        %v721 = vld [vmem:[#allocation11 + $0x280] sm:$0xff]
        %v722 = vld [vmem:[#allocation11 + $0x288] sm:$0xff]
        %v723 = vld [vmem:[#allocation11 + $0x290] sm:$0xff]
        %v724 = vld [vmem:[#allocation11 + $0x298] sm:$0xff]
        %v725 = vld [vmem:[#allocation11 + $0x2a0] sm:$0xff]
        %v726 = vld [vmem:[#allocation11 + $0x2a8] sm:$0xff]
        %v727 = vld [vmem:[#allocation11 + $0x2b0] sm:$0xff]
        %v728 = vld [vmem:[#allocation11 + $0x2b8] sm:$0xff]
        %v729 = vld [vmem:[#allocation11 + $0x2c0] sm:$0xff]
        %v730 = vld [vmem:[#allocation11 + $0x2c8] sm:$0xff]
        %v731 = vld [vmem:[#allocation11 + $0x2d0] sm:$0xff]
        %v732 = vld [vmem:[#allocation11 + $0x2d8] sm:$0xff]
        %v733 = vld [vmem:[#allocation11 + $0x2e0] sm:$0xff]
        %v734 = vld [vmem:[#allocation11 + $0x2e8] sm:$0xff]
        %v735 = vld [vmem:[#allocation11 + $0x2f0] sm:$0xff]
        %v736 = vld [vmem:[#allocation11 + $0x2f8] sm:$0xff]
        %v737 = vld [vmem:[#allocation11 + $0x300] sm:$0xff]
        %v738 = vld [vmem:[#allocation11 + $0x308] sm:$0xff]
        %v739 = vld [vmem:[#allocation11 + $0x310] sm:$0xff]
        %v740 = vld [vmem:[#allocation11 + $0x318] sm:$0xff]
        %v741 = vld [vmem:[#allocation11 + $0x320] sm:$0xff]
        %v742 = vld [vmem:[#allocation11 + $0x328] sm:$0xff]
        %v743 = vld [vmem:[#allocation11 + $0x330] sm:$0xff]
        %v744 = vld [vmem:[#allocation11 + $0x338] sm:$0xff]
        %v745 = vld [vmem:[#allocation11 + $0x340] sm:$0xff]
        %v746 = vld [vmem:[#allocation11 + $0x348] sm:$0xff]
        %v747 = vld [vmem:[#allocation11 + $0x350] sm:$0xff]
        %v748 = vld [vmem:[#allocation11 + $0x358] sm:$0xff]
        %v749 = vld [vmem:[#allocation11 + $0x360] sm:$0xff]
        %v750 = vld [vmem:[#allocation11 + $0x368] sm:$0xff]
        %v751 = vld [vmem:[#allocation11 + $0x370] sm:$0xff]
        %v752 = vld [vmem:[#allocation11 + $0x378] sm:$0xff]
        %v753 = vld [vmem:[#allocation11 + $0x380] sm:$0xff]
        %v754 = vld [vmem:[#allocation11 + $0x388] sm:$0xff]
        %v755 = vld [vmem:[#allocation11 + $0x390] sm:$0xff]
        %v756 = vld [vmem:[#allocation11 + $0x398] sm:$0xff]
        %v757 = vld [vmem:[#allocation11 + $0x3a0] sm:$0xff]
        %v758 = vld [vmem:[#allocation11 + $0x3a8] sm:$0xff]
        %v759 = vld [vmem:[#allocation11 + $0x3b0] sm:$0xff]
        %v760 = vld [vmem:[#allocation11 + $0x3b8] sm:$0xff]
        %v761 = vld [vmem:[#allocation11 + $0x3c0] sm:$0xff]
        %v762 = vld [vmem:[#allocation11 + $0x3c8] sm:$0xff]
        %v763 = vld [vmem:[#allocation11 + $0x3d0] sm:$0xff]
        %v764 = vld [vmem:[#allocation11 + $0x3d8] sm:$0xff]
        %v765 = vld [vmem:[#allocation11 + $0x3e0] sm:$0xff]
        %v766 = vld [vmem:[#allocation11 + $0x3e8] sm:$0xff]
        %v767 = vld [vmem:[#allocation11 + $0x3f0] sm:$0xff]
        %v768 = vld [vmem:[#allocation11 + $0x3f8] sm:$0xff]
        %v769 = vld [vmem:[#allocation11 + $0x400] sm:$0xff]
        %v770 = vld [vmem:[#allocation11 + $0x408] sm:$0xff]
        %v771 = vld [vmem:[#allocation11 + $0x410] sm:$0xff]
        %v772 = vld [vmem:[#allocation11 + $0x418] sm:$0xff]
        %v773 = vld [vmem:[#allocation11 + $0x420] sm:$0xff]
        %v774 = vld [vmem:[#allocation11 + $0x428] sm:$0xff]
        %v775 = vld [vmem:[#allocation11 + $0x430] sm:$0xff]
        %v776 = vld [vmem:[#allocation11 + $0x438] sm:$0xff]
        %v777 = vld [vmem:[#allocation11 + $0x440] sm:$0xff]
        %v778 = vld [vmem:[#allocation11 + $0x448] sm:$0xff]
        %v779 = vld [vmem:[#allocation11 + $0x450] sm:$0xff]
        %v780 = vld [vmem:[#allocation11 + $0x458] sm:$0xff]
        %v781 = vld [vmem:[#allocation11 + $0x460] sm:$0xff]
        %v782 = vld [vmem:[#allocation11 + $0x468] sm:$0xff]
        %v783 = vld [vmem:[#allocation11 + $0x470] sm:$0xff]
        %v784 = vld [vmem:[#allocation11 + $0x478] sm:$0xff]
        %v785 = vld [vmem:[%s5] sm:$0x1]
        %v787 = vperm.slane %v785, 0
        %789 = vmatpush.msra.mxu0 %v656
        %790 = vmatpush.msra.mxu0 %v655
        %791 = vmatpush.msra.mxu0 %v654
        %792 = vmatpush.msra.mxu0 %v653
        %793 = vmatpush.msra.mxu0 %v652
        %794 = vmatpush.msra.mxu0 %v651
        %795 = vmatpush.msra.mxu0 %v650
        %796 = vmatpush.msra.mxu0 %v649
        %797 = vmatpush.msra.mxu0 %v648
        %798 = vmatpush.msra.mxu0 %v647
        %799 = vmatpush.msra.mxu0 %v646
        %800 = vmatpush.msra.mxu0 %v645
        %801 = vmatpush.msra.mxu0 %v644
        %802 = vmatpush.msra.mxu0 %v643
        %803 = vmatpush.msra.mxu0 %v642
        %804 = vmatpush.msra.mxu0 %v641
        %805 = vmatmul.f32.gmra.mxu0 %v623
        %v806 = vpop.f32.mrf.mxu0
        %v807 = vadd.f32 %v787, %v806
        %808 = vmatmul.f32.gmra.mxu0 %v632
        %v809 = vpop.f32.mrf.mxu0
        %v810 = vadd.f32 %v787, %v809
        %811 = vdwg.mxu0
        %812 = vmatpush.msra.mxu0 %v672
        %813 = vmatpush.msra.mxu0 %v671
        %814 = vmatpush.msra.mxu0 %v670
        %815 = vmatpush.msra.mxu0 %v669
        %816 = vmatpush.msra.mxu0 %v668
        %817 = vmatpush.msra.mxu0 %v667
        %818 = vmatpush.msra.mxu0 %v666
        %819 = vmatpush.msra.mxu0 %v665
        %820 = vmatpush.msra.mxu0 %v664
        %821 = vmatpush.msra.mxu0 %v663
        %822 = vmatpush.msra.mxu0 %v662
        %823 = vmatpush.msra.mxu0 %v661
        %824 = vmatpush.msra.mxu0 %v660
        %825 = vmatpush.msra.mxu0 %v659
        %826 = vmatpush.msra.mxu0 %v658
        %827 = vmatpush.msra.mxu0 %v657
        %828 = vmatmul.f32.gmra.mxu0 %v624
        %v829 = vpop.f32.mrf.mxu0
        %v830 = vadd.f32 %v807, %v829
        %831 = vmatmul.f32.gmra.mxu0 %v633
        %v832 = vpop.f32.mrf.mxu0
        %v833 = vadd.f32 %v810, %v832
        %834 = vdwg.mxu0
        %835 = vmatpush.msra.mxu0 %v688
        %836 = vmatpush.msra.mxu0 %v687
        %837 = vmatpush.msra.mxu0 %v686
        %838 = vmatpush.msra.mxu0 %v685
        %839 = vmatpush.msra.mxu0 %v684
        %840 = vmatpush.msra.mxu0 %v683
        %841 = vmatpush.msra.mxu0 %v682
        %842 = vmatpush.msra.mxu0 %v681
        %843 = vmatpush.msra.mxu0 %v680
        %844 = vmatpush.msra.mxu0 %v679
        %845 = vmatpush.msra.mxu0 %v678
        %846 = vmatpush.msra.mxu0 %v677
        %847 = vmatpush.msra.mxu0 %v676
        %848 = vmatpush.msra.mxu0 %v675
        %849 = vmatpush.msra.mxu0 %v674
        %850 = vmatpush.msra.mxu0 %v673
        %851 = vmatmul.f32.gmra.mxu0 %v625
        %v852 = vpop.f32.mrf.mxu0
        %v853 = vadd.f32 %v830, %v852
        %854 = vmatmul.f32.gmra.mxu0 %v634
        %v855 = vpop.f32.mrf.mxu0
        %v856 = vadd.f32 %v833, %v855
        %857 = vdwg.mxu0
        %858 = vmatpush.msra.mxu0 %v704
        %859 = vmatpush.msra.mxu0 %v703
        %860 = vmatpush.msra.mxu0 %v702
        %861 = vmatpush.msra.mxu0 %v701
        %862 = vmatpush.msra.mxu0 %v700
        %863 = vmatpush.msra.mxu0 %v699
        %864 = vmatpush.msra.mxu0 %v698
        %865 = vmatpush.msra.mxu0 %v697
        %866 = vmatpush.msra.mxu0 %v696
        %867 = vmatpush.msra.mxu0 %v695
        %868 = vmatpush.msra.mxu0 %v694
        %869 = vmatpush.msra.mxu0 %v693
        %870 = vmatpush.msra.mxu0 %v692
        %871 = vmatpush.msra.mxu0 %v691
        %872 = vmatpush.msra.mxu0 %v690
        %873 = vmatpush.msra.mxu0 %v689
        %874 = vmatmul.f32.gmra.mxu0 %v626
        %v875 = vpop.f32.mrf.mxu0
        %v876 = vadd.f32 %v853, %v875
        %877 = vmatmul.f32.gmra.mxu0 %v635
        %v878 = vpop.f32.mrf.mxu0
        %v879 = vadd.f32 %v856, %v878
        %880 = vdwg.mxu0
        %881 = vmatpush.msra.mxu0 %v720
        %882 = vmatpush.msra.mxu0 %v719
        %883 = vmatpush.msra.mxu0 %v718
        %884 = vmatpush.msra.mxu0 %v717
        %885 = vmatpush.msra.mxu0 %v716
        %886 = vmatpush.msra.mxu0 %v715
        %887 = vmatpush.msra.mxu0 %v714
        %888 = vmatpush.msra.mxu0 %v713
        %889 = vmatpush.msra.mxu0 %v712
        %890 = vmatpush.msra.mxu0 %v711
        %891 = vmatpush.msra.mxu0 %v710
        %892 = vmatpush.msra.mxu0 %v709
        %893 = vmatpush.msra.mxu0 %v708
        %894 = vmatpush.msra.mxu0 %v707
        %895 = vmatpush.msra.mxu0 %v706
        %896 = vmatpush.msra.mxu0 %v705
        %897 = vmatmul.f32.gmra.mxu0 %v627
        %v898 = vpop.f32.mrf.mxu0
        %v899 = vadd.f32 %v876, %v898
        %900 = vmatmul.f32.gmra.mxu0 %v636
        %v901 = vpop.f32.mrf.mxu0
        %v902 = vadd.f32 %v879, %v901
        %903 = vdwg.mxu0
        %904 = vmatpush.msra.mxu0 %v736
        %905 = vmatpush.msra.mxu0 %v735
        %906 = vmatpush.msra.mxu0 %v734
        %907 = vmatpush.msra.mxu0 %v733
        %908 = vmatpush.msra.mxu0 %v732
        %909 = vmatpush.msra.mxu0 %v731
        %910 = vmatpush.msra.mxu0 %v730
        %911 = vmatpush.msra.mxu0 %v729
        %912 = vmatpush.msra.mxu0 %v728
        %913 = vmatpush.msra.mxu0 %v727
        %914 = vmatpush.msra.mxu0 %v726
        %915 = vmatpush.msra.mxu0 %v725
        %916 = vmatpush.msra.mxu0 %v724
        %917 = vmatpush.msra.mxu0 %v723
        %918 = vmatpush.msra.mxu0 %v722
        %919 = vmatpush.msra.mxu0 %v721
        %920 = vmatmul.f32.gmra.mxu0 %v628
        %v921 = vpop.f32.mrf.mxu0
        %v922 = vadd.f32 %v899, %v921
        %923 = vmatmul.f32.gmra.mxu0 %v637
        %v924 = vpop.f32.mrf.mxu0
        %v925 = vadd.f32 %v902, %v924
        %926 = vdwg.mxu0
        %927 = vmatpush.msra.mxu0 %v752
        %928 = vmatpush.msra.mxu0 %v751
        %929 = vmatpush.msra.mxu0 %v750
        %930 = vmatpush.msra.mxu0 %v749
        %931 = vmatpush.msra.mxu0 %v748
        %932 = vmatpush.msra.mxu0 %v747
        %933 = vmatpush.msra.mxu0 %v746
        %934 = vmatpush.msra.mxu0 %v745
        %935 = vmatpush.msra.mxu0 %v744
        %936 = vmatpush.msra.mxu0 %v743
        %937 = vmatpush.msra.mxu0 %v742
        %938 = vmatpush.msra.mxu0 %v741
        %939 = vmatpush.msra.mxu0 %v740
        %940 = vmatpush.msra.mxu0 %v739
        %941 = vmatpush.msra.mxu0 %v738
        %942 = vmatpush.msra.mxu0 %v737
        %943 = vmatmul.f32.gmra.mxu0 %v629
        %v944 = vpop.f32.mrf.mxu0
        %v945 = vadd.f32 %v922, %v944
        %946 = vmatmul.f32.gmra.mxu0 %v638
        %v947 = vpop.f32.mrf.mxu0
        %v948 = vadd.f32 %v925, %v947
        %949 = vdwg.mxu0
        %950 = vmatpush.msra.mxu0 %v768
        %951 = vmatpush.msra.mxu0 %v767
        %952 = vmatpush.msra.mxu0 %v766
        %953 = vmatpush.msra.mxu0 %v765
        %954 = vmatpush.msra.mxu0 %v764
        %955 = vmatpush.msra.mxu0 %v763
        %956 = vmatpush.msra.mxu0 %v762
        %957 = vmatpush.msra.mxu0 %v761
        %958 = vmatpush.msra.mxu0 %v760
        %959 = vmatpush.msra.mxu0 %v759
        %960 = vmatpush.msra.mxu0 %v758
        %961 = vmatpush.msra.mxu0 %v757
        %962 = vmatpush.msra.mxu0 %v756
        %963 = vmatpush.msra.mxu0 %v755
        %964 = vmatpush.msra.mxu0 %v754
        %965 = vmatpush.msra.mxu0 %v753
        %966 = vmatmul.f32.gmra.mxu0 %v630
        %v967 = vpop.f32.mrf.mxu0
        %v968 = vadd.f32 %v945, %v967
        %969 = vmatmul.f32.gmra.mxu0 %v639
        %v970 = vpop.f32.mrf.mxu0
        %v971 = vadd.f32 %v948, %v970
        %972 = vdwg.mxu0
        %973 = vmatpush.msra.mxu0 %v784
        %974 = vmatpush.msra.mxu0 %v783
        %975 = vmatpush.msra.mxu0 %v782
        %976 = vmatpush.msra.mxu0 %v781
        %977 = vmatpush.msra.mxu0 %v780
        %978 = vmatpush.msra.mxu0 %v779
        %979 = vmatpush.msra.mxu0 %v778
        %980 = vmatpush.msra.mxu0 %v777
        %981 = vmatpush.msra.mxu0 %v776
        %982 = vmatpush.msra.mxu0 %v775
        %983 = vmatpush.msra.mxu0 %v774
        %984 = vmatpush.msra.mxu0 %v773
        %985 = vmatpush.msra.mxu0 %v772
        %986 = vmatpush.msra.mxu0 %v771
        %987 = vmatpush.msra.mxu0 %v770
        %988 = vmatpush.msra.mxu0 %v769
        %989 = vmatmul.f32.gmra.mxu0 %v631
        %v990 = vpop.f32.mrf.mxu0
        %v991 = vadd.f32 %v968, %v990
        %992 = vmatmul.f32.gmra.mxu0 %v640
        %v993 = vpop.f32.mrf.mxu0
        %v994 = vadd.f32 %v971, %v993
        %995 = vdwg.mxu0
        %v996 = vadd.f32 %v991, %v994
        %v997 = vrot.slane %v996, 4
        %v998 = vadd.f32 %v996, %v997
        %v999 = vrot.slane %v998, 2
        %v1000 = vadd.f32 %v998, %v999
        %v1001 = vrot.slane %v1000, 1
        %v1002 = vadd.f32 %v1000, %v1001
        %v1003 = vrcp.pop 16.0
        %v1004 = vmul.f32 16.0, %v1003
        %v1005 = vsub.f32 1.0, %v1004
        %v1006 = vmul.f32 %v1003, %v1005
        %v1007 = vadd.f32 %v1003, %v1006
        %vm1008 = vweird.f32 %v1003
        %v1009 = vsel %vm1008, %v1003, %v1007
        %v1010 = vmul.f32 %v1002, %v1009
        %v1011 = vld [vmem:[#allocation2] sm:$0xff]
        %v1012 = vld [vmem:[#allocation2 + $0x10] sm:$0xff]
        %v1013 = vld [vmem:[#allocation2 + $0x20] sm:$0xff]
        %v1014 = vld [vmem:[#allocation2 + $0x30] sm:$0xff]
        %v1015 = vld [vmem:[#allocation2 + $0x40] sm:$0xff]
        %v1016 = vld [vmem:[#allocation2 + $0x50] sm:$0xff]
        %v1017 = vld [vmem:[#allocation2 + $0x60] sm:$0xff]
        %v1018 = vld [vmem:[#allocation2 + $0x70] sm:$0xff]
        %v1019 = vld [vmem:[#allocation2 + $0x80] sm:$0xff]
        %v1020 = vld [vmem:[#allocation2 + $0x90] sm:$0xff]
        %1021 = vst [vmem:[#allocation4] sm:$0xff] %v1011
        %1022 = vst [vmem:[#allocation4 + $0x48] sm:$0xff] %v1012
        %1023 = vst [vmem:[#allocation4 + $0x90] sm:$0xff] %v1013
        %1024 = vst [vmem:[#allocation4 + $0xd8] sm:$0xff] %v1014
        %1025 = vst [vmem:[#allocation4 + $0x120] sm:$0xff] %v1015
        %1026 = vst [vmem:[#allocation4 + $0x168] sm:$0xff] %v1016
        %1027 = vst [vmem:[#allocation4 + $0x1b0] sm:$0xff] %v1017
        %1028 = vst [vmem:[#allocation4 + $0x1f8] sm:$0xff] %v1018
        %1029 = vst [vmem:[#allocation4 + $0x8] sm:$0xff] %v1012
        %1030 = vst [vmem:[#allocation4 + $0x50] sm:$0xff] %v1013
        %1031 = vst [vmem:[#allocation4 + $0x98] sm:$0xff] %v1014
        %1032 = vst [vmem:[#allocation4 + $0xe0] sm:$0xff] %v1015
        %1033 = vst [vmem:[#allocation4 + $0x128] sm:$0xff] %v1016
        %1034 = vst [vmem:[#allocation4 + $0x170] sm:$0xff] %v1017
        %1035 = vst [vmem:[#allocation4 + $0x1b8] sm:$0xff] %v1018
        %1036 = vst [vmem:[#allocation4 + $0x200] sm:$0xff] %v1019
        %1037 = vst [vmem:[#allocation4 + $0x10] sm:$0xff] %v1013
        %1038 = vst [vmem:[#allocation4 + $0x58] sm:$0xff] %v1014
        %1039 = vst [vmem:[#allocation4 + $0xa0] sm:$0xff] %v1015
        %1040 = vst [vmem:[#allocation4 + $0xe8] sm:$0xff] %v1016
        %1041 = vst [vmem:[#allocation4 + $0x130] sm:$0xff] %v1017
        %1042 = vst [vmem:[#allocation4 + $0x178] sm:$0xff] %v1018
        %1043 = vst [vmem:[#allocation4 + $0x1c0] sm:$0xff] %v1019
        %1044 = vst [vmem:[#allocation4 + $0x208] sm:$0xff] %v1020
        %v1045 = vld [vmem:[#allocation2 + $0x1] sm:$0xff]
        %v1046 = vld [vmem:[#allocation2 + $0x11] sm:$0xff]
        %v1047 = vld [vmem:[#allocation2 + $0x21] sm:$0xff]
        %v1048 = vld [vmem:[#allocation2 + $0x31] sm:$0xff]
        %v1049 = vld [vmem:[#allocation2 + $0x41] sm:$0xff]
        %v1050 = vld [vmem:[#allocation2 + $0x51] sm:$0xff]
        %v1051 = vld [vmem:[#allocation2 + $0x61] sm:$0xff]
        %v1052 = vld [vmem:[#allocation2 + $0x71] sm:$0xff]
        %v1053 = vld [vmem:[#allocation2 + $0x81] sm:$0xff]
        %v1054 = vld [vmem:[#allocation2 + $0x91] sm:$0xff]
        %1055 = vst [vmem:[#allocation4 + $0x18] sm:$0xff] %v1045
        %1056 = vst [vmem:[#allocation4 + $0x60] sm:$0xff] %v1046
        %1057 = vst [vmem:[#allocation4 + $0xa8] sm:$0xff] %v1047
        %1058 = vst [vmem:[#allocation4 + $0xf0] sm:$0xff] %v1048
        %1059 = vst [vmem:[#allocation4 + $0x138] sm:$0xff] %v1049
        %1060 = vst [vmem:[#allocation4 + $0x180] sm:$0xff] %v1050
        %1061 = vst [vmem:[#allocation4 + $0x1c8] sm:$0xff] %v1051
        %1062 = vst [vmem:[#allocation4 + $0x210] sm:$0xff] %v1052
        %1063 = vst [vmem:[#allocation4 + $0x20] sm:$0xff] %v1046
        %1064 = vst [vmem:[#allocation4 + $0x68] sm:$0xff] %v1047
        %1065 = vst [vmem:[#allocation4 + $0xb0] sm:$0xff] %v1048
        %1066 = vst [vmem:[#allocation4 + $0xf8] sm:$0xff] %v1049
        %1067 = vst [vmem:[#allocation4 + $0x140] sm:$0xff] %v1050
        %1068 = vst [vmem:[#allocation4 + $0x188] sm:$0xff] %v1051
        %1069 = vst [vmem:[#allocation4 + $0x1d0] sm:$0xff] %v1052
        %1070 = vst [vmem:[#allocation4 + $0x218] sm:$0xff] %v1053
        %1071 = vst [vmem:[#allocation4 + $0x28] sm:$0xff] %v1047
        %1072 = vst [vmem:[#allocation4 + $0x70] sm:$0xff] %v1048
        %1073 = vst [vmem:[#allocation4 + $0xb8] sm:$0xff] %v1049
        %1074 = vst [vmem:[#allocation4 + $0x100] sm:$0xff] %v1050
        %1075 = vst [vmem:[#allocation4 + $0x148] sm:$0xff] %v1051
        %1076 = vst [vmem:[#allocation4 + $0x190] sm:$0xff] %v1052
        %1077 = vst [vmem:[#allocation4 + $0x1d8] sm:$0xff] %v1053
        %1078 = vst [vmem:[#allocation4 + $0x220] sm:$0xff] %v1054
        %v1079 = vld [vmem:[#allocation2 + $0x2] sm:$0xff]
        %v1080 = vld [vmem:[#allocation2 + $0x12] sm:$0xff]
        %v1081 = vld [vmem:[#allocation2 + $0x22] sm:$0xff]
        %v1082 = vld [vmem:[#allocation2 + $0x32] sm:$0xff]
        %v1083 = vld [vmem:[#allocation2 + $0x42] sm:$0xff]
        %v1084 = vld [vmem:[#allocation2 + $0x52] sm:$0xff]
        %v1085 = vld [vmem:[#allocation2 + $0x62] sm:$0xff]
        %v1086 = vld [vmem:[#allocation2 + $0x72] sm:$0xff]
        %v1087 = vld [vmem:[#allocation2 + $0x82] sm:$0xff]
        %v1088 = vld [vmem:[#allocation2 + $0x92] sm:$0xff]
        %1089 = vst [vmem:[#allocation4 + $0x30] sm:$0xff] %v1079
        %1090 = vst [vmem:[#allocation4 + $0x78] sm:$0xff] %v1080
        %1091 = vst [vmem:[#allocation4 + $0xc0] sm:$0xff] %v1081
        %1092 = vst [vmem:[#allocation4 + $0x108] sm:$0xff] %v1082
        %1093 = vst [vmem:[#allocation4 + $0x150] sm:$0xff] %v1083
        %1094 = vst [vmem:[#allocation4 + $0x198] sm:$0xff] %v1084
        %1095 = vst [vmem:[#allocation4 + $0x1e0] sm:$0xff] %v1085
        %1096 = vst [vmem:[#allocation4 + $0x228] sm:$0xff] %v1086
        %1097 = vst [vmem:[#allocation4 + $0x38] sm:$0xff] %v1080
        %1098 = vst [vmem:[#allocation4 + $0x80] sm:$0xff] %v1081
        %1099 = vst [vmem:[#allocation4 + $0xc8] sm:$0xff] %v1082
        %1100 = vst [vmem:[#allocation4 + $0x110] sm:$0xff] %v1083
        %1101 = vst [vmem:[#allocation4 + $0x158] sm:$0xff] %v1084
        %1102 = vst [vmem:[#allocation4 + $0x1a0] sm:$0xff] %v1085
        %1103 = vst [vmem:[#allocation4 + $0x1e8] sm:$0xff] %v1086
        %1104 = vst [vmem:[#allocation4 + $0x230] sm:$0xff] %v1087
        %1105 = vst [vmem:[#allocation4 + $0x40] sm:$0xff] %v1081
        %1106 = vst [vmem:[#allocation4 + $0x88] sm:$0xff] %v1082
        %1107 = vst [vmem:[#allocation4 + $0xd0] sm:$0xff] %v1083
        %1108 = vst [vmem:[#allocation4 + $0x118] sm:$0xff] %v1084
        %1109 = vst [vmem:[#allocation4 + $0x160] sm:$0xff] %v1085
        %1110 = vst [vmem:[#allocation4 + $0x1a8] sm:$0xff] %v1086
        %1111 = vst [vmem:[#allocation4 + $0x1f0] sm:$0xff] %v1087
        %1112 = vst [vmem:[#allocation4 + $0x238] sm:$0xff] %v1088
        %v1113 = vld [vmem:[#allocation4] sm:$0xff]
        %v1114 = vld [vmem:[#allocation4 + $0x8] sm:$0xff]
        %v1115 = vld [vmem:[#allocation4 + $0x10] sm:$0xff]
        %v1116 = vld [vmem:[#allocation4 + $0x18] sm:$0xff]
        %v1117 = vld [vmem:[#allocation4 + $0x20] sm:$0xff]
        %v1118 = vld [vmem:[#allocation4 + $0x28] sm:$0xff]
        %v1119 = vld [vmem:[#allocation4 + $0x30] sm:$0xff]
        %v1120 = vld [vmem:[#allocation4 + $0x38] sm:$0xff]
        %v1121 = vld [vmem:[#allocation4 + $0x40] sm:$0xff]
        %v1122 = vld [vmem:[#allocation4 + $0x48] sm:$0xff]
        %v1123 = vld [vmem:[#allocation4 + $0x50] sm:$0xff]
        %v1124 = vld [vmem:[#allocation4 + $0x58] sm:$0xff]
        %v1125 = vld [vmem:[#allocation4 + $0x60] sm:$0xff]
        %v1126 = vld [vmem:[#allocation4 + $0x68] sm:$0xff]
        %v1127 = vld [vmem:[#allocation4 + $0x70] sm:$0xff]
        %v1128 = vld [vmem:[#allocation4 + $0x78] sm:$0xff]
        %v1129 = vld [vmem:[#allocation4 + $0x80] sm:$0xff]
        %v1130 = vld [vmem:[#allocation4 + $0x88] sm:$0xff]
        %v1131 = vld [vmem:[#allocation4 + $0x90] sm:$0xff]
        %v1132 = vld [vmem:[#allocation4 + $0x98] sm:$0xff]
        %v1133 = vld [vmem:[#allocation4 + $0xa0] sm:$0xff]
        %v1134 = vld [vmem:[#allocation4 + $0xa8] sm:$0xff]
        %v1135 = vld [vmem:[#allocation4 + $0xb0] sm:$0xff]
        %v1136 = vld [vmem:[#allocation4 + $0xb8] sm:$0xff]
        %v1137 = vld [vmem:[#allocation4 + $0xc0] sm:$0xff]
        %v1138 = vld [vmem:[#allocation4 + $0xc8] sm:$0xff]
        %v1139 = vld [vmem:[#allocation4 + $0xd0] sm:$0xff]
        %v1140 = vld [vmem:[#allocation4 + $0xd8] sm:$0xff]
        %v1141 = vld [vmem:[#allocation4 + $0xe0] sm:$0xff]
        %v1142 = vld [vmem:[#allocation4 + $0xe8] sm:$0xff]
        %v1143 = vld [vmem:[#allocation4 + $0xf0] sm:$0xff]
        %v1144 = vld [vmem:[#allocation4 + $0xf8] sm:$0xff]
        %v1145 = vld [vmem:[#allocation4 + $0x100] sm:$0xff]
        %v1146 = vld [vmem:[#allocation4 + $0x108] sm:$0xff]
        %v1147 = vld [vmem:[#allocation4 + $0x110] sm:$0xff]
        %v1148 = vld [vmem:[#allocation4 + $0x118] sm:$0xff]
        %v1149 = vld [vmem:[#allocation4 + $0x120] sm:$0xff]
        %v1150 = vld [vmem:[#allocation4 + $0x128] sm:$0xff]
        %v1151 = vld [vmem:[#allocation4 + $0x130] sm:$0xff]
        %v1152 = vld [vmem:[#allocation4 + $0x138] sm:$0xff]
        %v1153 = vld [vmem:[#allocation4 + $0x140] sm:$0xff]
        %v1154 = vld [vmem:[#allocation4 + $0x148] sm:$0xff]
        %v1155 = vld [vmem:[#allocation4 + $0x150] sm:$0xff]
        %v1156 = vld [vmem:[#allocation4 + $0x158] sm:$0xff]
        %v1157 = vld [vmem:[#allocation4 + $0x160] sm:$0xff]
        %v1158 = vld [vmem:[#allocation4 + $0x168] sm:$0xff]
        %v1159 = vld [vmem:[#allocation4 + $0x170] sm:$0xff]
        %v1160 = vld [vmem:[#allocation4 + $0x178] sm:$0xff]
        %v1161 = vld [vmem:[#allocation4 + $0x180] sm:$0xff]
        %v1162 = vld [vmem:[#allocation4 + $0x188] sm:$0xff]
        %v1163 = vld [vmem:[#allocation4 + $0x190] sm:$0xff]
        %v1164 = vld [vmem:[#allocation4 + $0x198] sm:$0xff]
        %v1165 = vld [vmem:[#allocation4 + $0x1a0] sm:$0xff]
        %v1166 = vld [vmem:[#allocation4 + $0x1a8] sm:$0xff]
        %v1167 = vld [vmem:[#allocation4 + $0x1b0] sm:$0xff]
        %v1168 = vld [vmem:[#allocation4 + $0x1b8] sm:$0xff]
        %v1169 = vld [vmem:[#allocation4 + $0x1c0] sm:$0xff]
        %v1170 = vld [vmem:[#allocation4 + $0x1c8] sm:$0xff]
        %v1171 = vld [vmem:[#allocation4 + $0x1d0] sm:$0xff]
        %v1172 = vld [vmem:[#allocation4 + $0x1d8] sm:$0xff]
        %v1173 = vld [vmem:[#allocation4 + $0x1e0] sm:$0xff]
        %v1174 = vld [vmem:[#allocation4 + $0x1e8] sm:$0xff]
        %v1175 = vld [vmem:[#allocation4 + $0x1f0] sm:$0xff]
        %v1176 = vld [vmem:[#allocation4 + $0x1f8] sm:$0xff]
        %v1177 = vld [vmem:[#allocation4 + $0x200] sm:$0xff]
        %v1178 = vld [vmem:[#allocation4 + $0x208] sm:$0xff]
        %v1179 = vld [vmem:[#allocation4 + $0x210] sm:$0xff]
        %v1180 = vld [vmem:[#allocation4 + $0x218] sm:$0xff]
        %v1181 = vld [vmem:[#allocation4 + $0x220] sm:$0xff]
        %v1182 = vld [vmem:[#allocation4 + $0x228] sm:$0xff]
        %v1183 = vld [vmem:[#allocation4 + $0x230] sm:$0xff]
        %v1184 = vld [vmem:[#allocation4 + $0x238] sm:$0xff]
        %v1185 = vld [vmem:[#allocation10] sm:$0xff]
        %v1186 = vld [vmem:[#allocation10 + $0x8] sm:$0xff]
        %v1187 = vld [vmem:[#allocation10 + $0x10] sm:$0xff]
        %v1188 = vld [vmem:[#allocation10 + $0x18] sm:$0xff]
        %v1189 = vld [vmem:[#allocation10 + $0x20] sm:$0xff]
        %v1190 = vld [vmem:[#allocation10 + $0x28] sm:$0xff]
        %v1191 = vld [vmem:[#allocation10 + $0x30] sm:$0xff]
        %v1192 = vld [vmem:[#allocation10 + $0x38] sm:$0xff]
        %v1193 = vld [vmem:[#allocation10 + $0x40] sm:$0xff]
        %v1194 = vld [vmem:[#allocation10 + $0x48] sm:$0xff]
        %v1195 = vld [vmem:[#allocation10 + $0x50] sm:$0xff]
        %v1196 = vld [vmem:[#allocation10 + $0x58] sm:$0xff]
        %v1197 = vld [vmem:[#allocation10 + $0x60] sm:$0xff]
        %v1198 = vld [vmem:[#allocation10 + $0x68] sm:$0xff]
        %v1199 = vld [vmem:[#allocation10 + $0x70] sm:$0xff]
        %v1200 = vld [vmem:[#allocation10 + $0x78] sm:$0xff]
        %v1201 = vld [vmem:[#allocation10 + $0x80] sm:$0xff]
        %v1202 = vld [vmem:[#allocation10 + $0x88] sm:$0xff]
        %v1203 = vld [vmem:[#allocation10 + $0x90] sm:$0xff]
        %v1204 = vld [vmem:[#allocation10 + $0x98] sm:$0xff]
        %v1205 = vld [vmem:[#allocation10 + $0xa0] sm:$0xff]
        %v1206 = vld [vmem:[#allocation10 + $0xa8] sm:$0xff]
        %v1207 = vld [vmem:[#allocation10 + $0xb0] sm:$0xff]
        %v1208 = vld [vmem:[#allocation10 + $0xb8] sm:$0xff]
        %v1209 = vld [vmem:[#allocation10 + $0xc0] sm:$0xff]
        %v1210 = vld [vmem:[#allocation10 + $0xc8] sm:$0xff]
        %v1211 = vld [vmem:[#allocation10 + $0xd0] sm:$0xff]
        %v1212 = vld [vmem:[#allocation10 + $0xd8] sm:$0xff]
        %v1213 = vld [vmem:[#allocation10 + $0xe0] sm:$0xff]
        %v1214 = vld [vmem:[#allocation10 + $0xe8] sm:$0xff]
        %v1215 = vld [vmem:[#allocation10 + $0xf0] sm:$0xff]
        %v1216 = vld [vmem:[#allocation10 + $0xf8] sm:$0xff]
        %v1217 = vld [vmem:[#allocation10 + $0x100] sm:$0xff]
        %v1218 = vld [vmem:[#allocation10 + $0x108] sm:$0xff]
        %v1219 = vld [vmem:[#allocation10 + $0x110] sm:$0xff]
        %v1220 = vld [vmem:[#allocation10 + $0x118] sm:$0xff]
        %v1221 = vld [vmem:[#allocation10 + $0x120] sm:$0xff]
        %v1222 = vld [vmem:[#allocation10 + $0x128] sm:$0xff]
        %v1223 = vld [vmem:[#allocation10 + $0x130] sm:$0xff]
        %v1224 = vld [vmem:[#allocation10 + $0x138] sm:$0xff]
        %v1225 = vld [vmem:[#allocation10 + $0x140] sm:$0xff]
        %v1226 = vld [vmem:[#allocation10 + $0x148] sm:$0xff]
        %v1227 = vld [vmem:[#allocation10 + $0x150] sm:$0xff]
        %v1228 = vld [vmem:[#allocation10 + $0x158] sm:$0xff]
        %v1229 = vld [vmem:[#allocation10 + $0x160] sm:$0xff]
        %v1230 = vld [vmem:[#allocation10 + $0x168] sm:$0xff]
        %v1231 = vld [vmem:[#allocation10 + $0x170] sm:$0xff]
        %v1232 = vld [vmem:[#allocation10 + $0x178] sm:$0xff]
        %v1233 = vld [vmem:[#allocation10 + $0x180] sm:$0xff]
        %v1234 = vld [vmem:[#allocation10 + $0x188] sm:$0xff]
        %v1235 = vld [vmem:[#allocation10 + $0x190] sm:$0xff]
        %v1236 = vld [vmem:[#allocation10 + $0x198] sm:$0xff]
        %v1237 = vld [vmem:[#allocation10 + $0x1a0] sm:$0xff]
        %v1238 = vld [vmem:[#allocation10 + $0x1a8] sm:$0xff]
        %v1239 = vld [vmem:[#allocation10 + $0x1b0] sm:$0xff]
        %v1240 = vld [vmem:[#allocation10 + $0x1b8] sm:$0xff]
        %v1241 = vld [vmem:[#allocation10 + $0x1c0] sm:$0xff]
        %v1242 = vld [vmem:[#allocation10 + $0x1c8] sm:$0xff]
        %v1243 = vld [vmem:[#allocation10 + $0x1d0] sm:$0xff]
        %v1244 = vld [vmem:[#allocation10 + $0x1d8] sm:$0xff]
        %v1245 = vld [vmem:[#allocation10 + $0x1e0] sm:$0xff]
        %v1246 = vld [vmem:[#allocation10 + $0x1e8] sm:$0xff]
        %v1247 = vld [vmem:[#allocation10 + $0x1f0] sm:$0xff]
        %v1248 = vld [vmem:[#allocation10 + $0x1f8] sm:$0xff]
        %v1249 = vld [vmem:[#allocation10 + $0x200] sm:$0xff]
        %v1250 = vld [vmem:[#allocation10 + $0x208] sm:$0xff]
        %v1251 = vld [vmem:[#allocation10 + $0x210] sm:$0xff]
        %v1252 = vld [vmem:[#allocation10 + $0x218] sm:$0xff]
        %v1253 = vld [vmem:[#allocation10 + $0x220] sm:$0xff]
        %v1254 = vld [vmem:[#allocation10 + $0x228] sm:$0xff]
        %v1255 = vld [vmem:[#allocation10 + $0x230] sm:$0xff]
        %v1256 = vld [vmem:[#allocation10 + $0x238] sm:$0xff]
        %v1257 = vld [vmem:[#allocation10 + $0x240] sm:$0xff]
        %v1258 = vld [vmem:[#allocation10 + $0x248] sm:$0xff]
        %v1259 = vld [vmem:[#allocation10 + $0x250] sm:$0xff]
        %v1260 = vld [vmem:[#allocation10 + $0x258] sm:$0xff]
        %v1261 = vld [vmem:[#allocation10 + $0x260] sm:$0xff]
        %v1262 = vld [vmem:[#allocation10 + $0x268] sm:$0xff]
        %v1263 = vld [vmem:[#allocation10 + $0x270] sm:$0xff]
        %v1264 = vld [vmem:[#allocation10 + $0x278] sm:$0xff]
        %v1265 = vld [vmem:[#allocation10 + $0x280] sm:$0xff]
        %v1266 = vld [vmem:[#allocation10 + $0x288] sm:$0xff]
        %v1267 = vld [vmem:[#allocation10 + $0x290] sm:$0xff]
        %v1268 = vld [vmem:[#allocation10 + $0x298] sm:$0xff]
        %v1269 = vld [vmem:[#allocation10 + $0x2a0] sm:$0xff]
        %v1270 = vld [vmem:[#allocation10 + $0x2a8] sm:$0xff]
        %v1271 = vld [vmem:[#allocation10 + $0x2b0] sm:$0xff]
        %v1272 = vld [vmem:[#allocation10 + $0x2b8] sm:$0xff]
        %v1273 = vld [vmem:[#allocation10 + $0x2c0] sm:$0xff]
        %v1274 = vld [vmem:[#allocation10 + $0x2c8] sm:$0xff]
        %v1275 = vld [vmem:[#allocation10 + $0x2d0] sm:$0xff]
        %v1276 = vld [vmem:[#allocation10 + $0x2d8] sm:$0xff]
        %v1277 = vld [vmem:[#allocation10 + $0x2e0] sm:$0xff]
        %v1278 = vld [vmem:[#allocation10 + $0x2e8] sm:$0xff]
        %v1279 = vld [vmem:[#allocation10 + $0x2f0] sm:$0xff]
        %v1280 = vld [vmem:[#allocation10 + $0x2f8] sm:$0xff]
        %v1281 = vld [vmem:[#allocation10 + $0x300] sm:$0xff]
        %v1282 = vld [vmem:[#allocation10 + $0x308] sm:$0xff]
        %v1283 = vld [vmem:[#allocation10 + $0x310] sm:$0xff]
        %v1284 = vld [vmem:[#allocation10 + $0x318] sm:$0xff]
        %v1285 = vld [vmem:[#allocation10 + $0x320] sm:$0xff]
        %v1286 = vld [vmem:[#allocation10 + $0x328] sm:$0xff]
        %v1287 = vld [vmem:[#allocation10 + $0x330] sm:$0xff]
        %v1288 = vld [vmem:[#allocation10 + $0x338] sm:$0xff]
        %v1289 = vld [vmem:[#allocation10 + $0x340] sm:$0xff]
        %v1290 = vld [vmem:[#allocation10 + $0x348] sm:$0xff]
        %v1291 = vld [vmem:[#allocation10 + $0x350] sm:$0xff]
        %v1292 = vld [vmem:[#allocation10 + $0x358] sm:$0xff]
        %v1293 = vld [vmem:[#allocation10 + $0x360] sm:$0xff]
        %v1294 = vld [vmem:[#allocation10 + $0x368] sm:$0xff]
        %v1295 = vld [vmem:[#allocation10 + $0x370] sm:$0xff]
        %v1296 = vld [vmem:[#allocation10 + $0x378] sm:$0xff]
        %v1297 = vld [vmem:[#allocation10 + $0x380] sm:$0xff]
        %v1298 = vld [vmem:[#allocation10 + $0x388] sm:$0xff]
        %v1299 = vld [vmem:[#allocation10 + $0x390] sm:$0xff]
        %v1300 = vld [vmem:[#allocation10 + $0x398] sm:$0xff]
        %v1301 = vld [vmem:[#allocation10 + $0x3a0] sm:$0xff]
        %v1302 = vld [vmem:[#allocation10 + $0x3a8] sm:$0xff]
        %v1303 = vld [vmem:[#allocation10 + $0x3b0] sm:$0xff]
        %v1304 = vld [vmem:[#allocation10 + $0x3b8] sm:$0xff]
        %v1305 = vld [vmem:[#allocation10 + $0x3c0] sm:$0xff]
        %v1306 = vld [vmem:[#allocation10 + $0x3c8] sm:$0xff]
        %v1307 = vld [vmem:[#allocation10 + $0x3d0] sm:$0xff]
        %v1308 = vld [vmem:[#allocation10 + $0x3d8] sm:$0xff]
        %v1309 = vld [vmem:[#allocation10 + $0x3e0] sm:$0xff]
        %v1310 = vld [vmem:[#allocation10 + $0x3e8] sm:$0xff]
        %v1311 = vld [vmem:[#allocation10 + $0x3f0] sm:$0xff]
        %v1312 = vld [vmem:[#allocation10 + $0x3f8] sm:$0xff]
        %v1313 = vld [vmem:[#allocation10 + $0x400] sm:$0xff]
        %v1314 = vld [vmem:[#allocation10 + $0x408] sm:$0xff]
        %v1315 = vld [vmem:[#allocation10 + $0x410] sm:$0xff]
        %v1316 = vld [vmem:[#allocation10 + $0x418] sm:$0xff]
        %v1317 = vld [vmem:[#allocation10 + $0x420] sm:$0xff]
        %v1318 = vld [vmem:[#allocation10 + $0x428] sm:$0xff]
        %v1319 = vld [vmem:[#allocation10 + $0x430] sm:$0xff]
        %v1320 = vld [vmem:[#allocation10 + $0x438] sm:$0xff]
        %v1321 = vld [vmem:[#allocation10 + $0x440] sm:$0xff]
        %v1322 = vld [vmem:[#allocation10 + $0x448] sm:$0xff]
        %v1323 = vld [vmem:[#allocation10 + $0x450] sm:$0xff]
        %v1324 = vld [vmem:[#allocation10 + $0x458] sm:$0xff]
        %v1325 = vld [vmem:[#allocation10 + $0x460] sm:$0xff]
        %v1326 = vld [vmem:[#allocation10 + $0x468] sm:$0xff]
        %v1327 = vld [vmem:[#allocation10 + $0x470] sm:$0xff]
        %v1328 = vld [vmem:[#allocation10 + $0x478] sm:$0xff]
        %v1329 = vld [vmem:[%s3] sm:$0x1]
        %v1331 = vperm.slane %v1329, 0
        %1333 = vmatpush.msra.mxu0 %v1200
        %1334 = vmatpush.msra.mxu0 %v1199
        %1335 = vmatpush.msra.mxu0 %v1198
        %1336 = vmatpush.msra.mxu0 %v1197
        %1337 = vmatpush.msra.mxu0 %v1196
        %1338 = vmatpush.msra.mxu0 %v1195
        %1339 = vmatpush.msra.mxu0 %v1194
        %1340 = vmatpush.msra.mxu0 %v1193
        %1341 = vmatpush.msra.mxu0 %v1192
        %1342 = vmatpush.msra.mxu0 %v1191
        %1343 = vmatpush.msra.mxu0 %v1190
        %1344 = vmatpush.msra.mxu0 %v1189
        %1345 = vmatpush.msra.mxu0 %v1188
        %1346 = vmatpush.msra.mxu0 %v1187
        %1347 = vmatpush.msra.mxu0 %v1186
        %1348 = vmatpush.msra.mxu0 %v1185
        %1349 = vmatmul.f32.gmra.mxu0 %v1113
        %v1350 = vpop.f32.mrf.mxu0
        %v1351 = vadd.f32 %v1331, %v1350
        %1352 = vmatmul.f32.gmra.mxu0 %v1122
        %v1353 = vpop.f32.mrf.mxu0
        %v1354 = vadd.f32 %v1331, %v1353
        %1355 = vmatmul.f32.gmra.mxu0 %v1131
        %v1356 = vpop.f32.mrf.mxu0
        %v1357 = vadd.f32 %v1331, %v1356
        %1358 = vmatmul.f32.gmra.mxu0 %v1140
        %v1359 = vpop.f32.mrf.mxu0
        %v1360 = vadd.f32 %v1331, %v1359
        %1361 = vmatmul.f32.gmra.mxu0 %v1149
        %v1362 = vpop.f32.mrf.mxu0
        %v1363 = vadd.f32 %v1331, %v1362
        %1364 = vmatmul.f32.gmra.mxu0 %v1158
        %v1365 = vpop.f32.mrf.mxu0
        %v1366 = vadd.f32 %v1331, %v1365
        %1367 = vmatmul.f32.gmra.mxu0 %v1167
        %v1368 = vpop.f32.mrf.mxu0
        %v1369 = vadd.f32 %v1331, %v1368
        %1370 = vmatmul.f32.gmra.mxu0 %v1176
        %v1371 = vpop.f32.mrf.mxu0
        %v1372 = vadd.f32 %v1331, %v1371
        %1373 = vdwg.mxu0
        %1374 = vmatpush.msra.mxu0 %v1216
        %1375 = vmatpush.msra.mxu0 %v1215
        %1376 = vmatpush.msra.mxu0 %v1214
        %1377 = vmatpush.msra.mxu0 %v1213
        %1378 = vmatpush.msra.mxu0 %v1212
        %1379 = vmatpush.msra.mxu0 %v1211
        %1380 = vmatpush.msra.mxu0 %v1210
        %1381 = vmatpush.msra.mxu0 %v1209
        %1382 = vmatpush.msra.mxu0 %v1208
        %1383 = vmatpush.msra.mxu0 %v1207
        %1384 = vmatpush.msra.mxu0 %v1206
        %1385 = vmatpush.msra.mxu0 %v1205
        %1386 = vmatpush.msra.mxu0 %v1204
        %1387 = vmatpush.msra.mxu0 %v1203
        %1388 = vmatpush.msra.mxu0 %v1202
        %1389 = vmatpush.msra.mxu0 %v1201
        %1390 = vmatmul.f32.gmra.mxu0 %v1114
        %v1391 = vpop.f32.mrf.mxu0
        %v1392 = vadd.f32 %v1351, %v1391
        %1393 = vmatmul.f32.gmra.mxu0 %v1123
        %v1394 = vpop.f32.mrf.mxu0
        %v1395 = vadd.f32 %v1354, %v1394
        %1396 = vmatmul.f32.gmra.mxu0 %v1132
        %v1397 = vpop.f32.mrf.mxu0
        %v1398 = vadd.f32 %v1357, %v1397
        %1399 = vmatmul.f32.gmra.mxu0 %v1141
        %v1400 = vpop.f32.mrf.mxu0
        %v1401 = vadd.f32 %v1360, %v1400
        %1402 = vmatmul.f32.gmra.mxu0 %v1150
        %v1403 = vpop.f32.mrf.mxu0
        %v1404 = vadd.f32 %v1363, %v1403
        %1405 = vmatmul.f32.gmra.mxu0 %v1159
        %v1406 = vpop.f32.mrf.mxu0
        %v1407 = vadd.f32 %v1366, %v1406
        %1408 = vmatmul.f32.gmra.mxu0 %v1168
        %v1409 = vpop.f32.mrf.mxu0
        %v1410 = vadd.f32 %v1369, %v1409
        %1411 = vmatmul.f32.gmra.mxu0 %v1177
        %v1412 = vpop.f32.mrf.mxu0
        %v1413 = vadd.f32 %v1372, %v1412
        %1414 = vdwg.mxu0
        %1415 = vmatpush.msra.mxu0 %v1232
        %1416 = vmatpush.msra.mxu0 %v1231
        %1417 = vmatpush.msra.mxu0 %v1230
        %1418 = vmatpush.msra.mxu0 %v1229
        %1419 = vmatpush.msra.mxu0 %v1228
        %1420 = vmatpush.msra.mxu0 %v1227
        %1421 = vmatpush.msra.mxu0 %v1226
        %1422 = vmatpush.msra.mxu0 %v1225
        %1423 = vmatpush.msra.mxu0 %v1224
        %1424 = vmatpush.msra.mxu0 %v1223
        %1425 = vmatpush.msra.mxu0 %v1222
        %1426 = vmatpush.msra.mxu0 %v1221
        %1427 = vmatpush.msra.mxu0 %v1220
        %1428 = vmatpush.msra.mxu0 %v1219
        %1429 = vmatpush.msra.mxu0 %v1218
        %1430 = vmatpush.msra.mxu0 %v1217
        %1431 = vmatmul.f32.gmra.mxu0 %v1115
        %v1432 = vpop.f32.mrf.mxu0
        %v1433 = vadd.f32 %v1392, %v1432
        %1434 = vmatmul.f32.gmra.mxu0 %v1124
        %v1435 = vpop.f32.mrf.mxu0
        %v1436 = vadd.f32 %v1395, %v1435
        %1437 = vmatmul.f32.gmra.mxu0 %v1133
        %v1438 = vpop.f32.mrf.mxu0
        %v1439 = vadd.f32 %v1398, %v1438
        %1440 = vmatmul.f32.gmra.mxu0 %v1142
        %v1441 = vpop.f32.mrf.mxu0
        %v1442 = vadd.f32 %v1401, %v1441
        %1443 = vmatmul.f32.gmra.mxu0 %v1151
        %v1444 = vpop.f32.mrf.mxu0
        %v1445 = vadd.f32 %v1404, %v1444
        %1446 = vmatmul.f32.gmra.mxu0 %v1160
        %v1447 = vpop.f32.mrf.mxu0
        %v1448 = vadd.f32 %v1407, %v1447
        %1449 = vmatmul.f32.gmra.mxu0 %v1169
        %v1450 = vpop.f32.mrf.mxu0
        %v1451 = vadd.f32 %v1410, %v1450
        %1452 = vmatmul.f32.gmra.mxu0 %v1178
        %v1453 = vpop.f32.mrf.mxu0
        %v1454 = vadd.f32 %v1413, %v1453
        %1455 = vdwg.mxu0
        %1456 = vmatpush.msra.mxu0 %v1248
        %1457 = vmatpush.msra.mxu0 %v1247
        %1458 = vmatpush.msra.mxu0 %v1246
        %1459 = vmatpush.msra.mxu0 %v1245
        %1460 = vmatpush.msra.mxu0 %v1244
        %1461 = vmatpush.msra.mxu0 %v1243
        %1462 = vmatpush.msra.mxu0 %v1242
        %1463 = vmatpush.msra.mxu0 %v1241
        %1464 = vmatpush.msra.mxu0 %v1240
        %1465 = vmatpush.msra.mxu0 %v1239
        %1466 = vmatpush.msra.mxu0 %v1238
        %1467 = vmatpush.msra.mxu0 %v1237
        %1468 = vmatpush.msra.mxu0 %v1236
        %1469 = vmatpush.msra.mxu0 %v1235
        %1470 = vmatpush.msra.mxu0 %v1234
        %1471 = vmatpush.msra.mxu0 %v1233
        %1472 = vmatmul.f32.gmra.mxu0 %v1116
        %v1473 = vpop.f32.mrf.mxu0
        %v1474 = vadd.f32 %v1433, %v1473
        %1475 = vmatmul.f32.gmra.mxu0 %v1125
        %v1476 = vpop.f32.mrf.mxu0
        %v1477 = vadd.f32 %v1436, %v1476
        %1478 = vmatmul.f32.gmra.mxu0 %v1134
        %v1479 = vpop.f32.mrf.mxu0
        %v1480 = vadd.f32 %v1439, %v1479
        %1481 = vmatmul.f32.gmra.mxu0 %v1143
        %v1482 = vpop.f32.mrf.mxu0
        %v1483 = vadd.f32 %v1442, %v1482
        %1484 = vmatmul.f32.gmra.mxu0 %v1152
        %v1485 = vpop.f32.mrf.mxu0
        %v1486 = vadd.f32 %v1445, %v1485
        %1487 = vmatmul.f32.gmra.mxu0 %v1161
        %v1488 = vpop.f32.mrf.mxu0
        %v1489 = vadd.f32 %v1448, %v1488
        %1490 = vmatmul.f32.gmra.mxu0 %v1170
        %v1491 = vpop.f32.mrf.mxu0
        %v1492 = vadd.f32 %v1451, %v1491
        %1493 = vmatmul.f32.gmra.mxu0 %v1179
        %v1494 = vpop.f32.mrf.mxu0
        %v1495 = vadd.f32 %v1454, %v1494
        %1496 = vdwg.mxu0
        %1497 = vmatpush.msra.mxu0 %v1264
        %1498 = vmatpush.msra.mxu0 %v1263
        %1499 = vmatpush.msra.mxu0 %v1262
        %1500 = vmatpush.msra.mxu0 %v1261
        %1501 = vmatpush.msra.mxu0 %v1260
        %1502 = vmatpush.msra.mxu0 %v1259
        %1503 = vmatpush.msra.mxu0 %v1258
        %1504 = vmatpush.msra.mxu0 %v1257
        %1505 = vmatpush.msra.mxu0 %v1256
        %1506 = vmatpush.msra.mxu0 %v1255
        %1507 = vmatpush.msra.mxu0 %v1254
        %1508 = vmatpush.msra.mxu0 %v1253
        %1509 = vmatpush.msra.mxu0 %v1252
        %1510 = vmatpush.msra.mxu0 %v1251
        %1511 = vmatpush.msra.mxu0 %v1250
        %1512 = vmatpush.msra.mxu0 %v1249
        %1513 = vmatmul.f32.gmra.mxu0 %v1117
        %v1514 = vpop.f32.mrf.mxu0
        %v1515 = vadd.f32 %v1474, %v1514
        %1516 = vmatmul.f32.gmra.mxu0 %v1126
        %v1517 = vpop.f32.mrf.mxu0
        %v1518 = vadd.f32 %v1477, %v1517
        %1519 = vmatmul.f32.gmra.mxu0 %v1135
        %v1520 = vpop.f32.mrf.mxu0
        %v1521 = vadd.f32 %v1480, %v1520
        %1522 = vmatmul.f32.gmra.mxu0 %v1144
        %v1523 = vpop.f32.mrf.mxu0
        %v1524 = vadd.f32 %v1483, %v1523
        %1525 = vmatmul.f32.gmra.mxu0 %v1153
        %v1526 = vpop.f32.mrf.mxu0
        %v1527 = vadd.f32 %v1486, %v1526
        %1528 = vmatmul.f32.gmra.mxu0 %v1162
        %v1529 = vpop.f32.mrf.mxu0
        %v1530 = vadd.f32 %v1489, %v1529
        %1531 = vmatmul.f32.gmra.mxu0 %v1171
        %v1532 = vpop.f32.mrf.mxu0
        %v1533 = vadd.f32 %v1492, %v1532
        %1534 = vmatmul.f32.gmra.mxu0 %v1180
        %v1535 = vpop.f32.mrf.mxu0
        %v1536 = vadd.f32 %v1495, %v1535
        %1537 = vdwg.mxu0
        %1538 = vmatpush.msra.mxu0 %v1280
        %1539 = vmatpush.msra.mxu0 %v1279
        %1540 = vmatpush.msra.mxu0 %v1278
        %1541 = vmatpush.msra.mxu0 %v1277
        %1542 = vmatpush.msra.mxu0 %v1276
        %1543 = vmatpush.msra.mxu0 %v1275
        %1544 = vmatpush.msra.mxu0 %v1274
        %1545 = vmatpush.msra.mxu0 %v1273
        %1546 = vmatpush.msra.mxu0 %v1272
        %1547 = vmatpush.msra.mxu0 %v1271
        %1548 = vmatpush.msra.mxu0 %v1270
        %1549 = vmatpush.msra.mxu0 %v1269
        %1550 = vmatpush.msra.mxu0 %v1268
        %1551 = vmatpush.msra.mxu0 %v1267
        %1552 = vmatpush.msra.mxu0 %v1266
        %1553 = vmatpush.msra.mxu0 %v1265
        %1554 = vmatmul.f32.gmra.mxu0 %v1118
        %v1555 = vpop.f32.mrf.mxu0
        %v1556 = vadd.f32 %v1515, %v1555
        %1557 = vmatmul.f32.gmra.mxu0 %v1127
        %v1558 = vpop.f32.mrf.mxu0
        %v1559 = vadd.f32 %v1518, %v1558
        %1560 = vmatmul.f32.gmra.mxu0 %v1136
        %v1561 = vpop.f32.mrf.mxu0
        %v1562 = vadd.f32 %v1521, %v1561
        %1563 = vmatmul.f32.gmra.mxu0 %v1145
        %v1564 = vpop.f32.mrf.mxu0
        %v1565 = vadd.f32 %v1524, %v1564
        %1566 = vmatmul.f32.gmra.mxu0 %v1154
        %v1567 = vpop.f32.mrf.mxu0
        %v1568 = vadd.f32 %v1527, %v1567
        %1569 = vmatmul.f32.gmra.mxu0 %v1163
        %v1570 = vpop.f32.mrf.mxu0
        %v1571 = vadd.f32 %v1530, %v1570
        %1572 = vmatmul.f32.gmra.mxu0 %v1172
        %v1573 = vpop.f32.mrf.mxu0
        %v1574 = vadd.f32 %v1533, %v1573
        %1575 = vmatmul.f32.gmra.mxu0 %v1181
        %v1576 = vpop.f32.mrf.mxu0
        %v1577 = vadd.f32 %v1536, %v1576
        %1578 = vdwg.mxu0
        %1579 = vmatpush.msra.mxu0 %v1296
        %1580 = vmatpush.msra.mxu0 %v1295
        %1581 = vmatpush.msra.mxu0 %v1294
        %1582 = vmatpush.msra.mxu0 %v1293
        %1583 = vmatpush.msra.mxu0 %v1292
        %1584 = vmatpush.msra.mxu0 %v1291
        %1585 = vmatpush.msra.mxu0 %v1290
        %1586 = vmatpush.msra.mxu0 %v1289
        %1587 = vmatpush.msra.mxu0 %v1288
        %1588 = vmatpush.msra.mxu0 %v1287
        %1589 = vmatpush.msra.mxu0 %v1286
        %1590 = vmatpush.msra.mxu0 %v1285
        %1591 = vmatpush.msra.mxu0 %v1284
        %1592 = vmatpush.msra.mxu0 %v1283
        %1593 = vmatpush.msra.mxu0 %v1282
        %1594 = vmatpush.msra.mxu0 %v1281
        %1595 = vmatmul.f32.gmra.mxu0 %v1119
        %v1596 = vpop.f32.mrf.mxu0
        %v1597 = vadd.f32 %v1556, %v1596
        %1598 = vmatmul.f32.gmra.mxu0 %v1128
        %v1599 = vpop.f32.mrf.mxu0
        %v1600 = vadd.f32 %v1559, %v1599
        %1601 = vmatmul.f32.gmra.mxu0 %v1137
        %v1602 = vpop.f32.mrf.mxu0
        %v1603 = vadd.f32 %v1562, %v1602
        %1604 = vmatmul.f32.gmra.mxu0 %v1146
        %v1605 = vpop.f32.mrf.mxu0
        %v1606 = vadd.f32 %v1565, %v1605
        %1607 = vmatmul.f32.gmra.mxu0 %v1155
        %v1608 = vpop.f32.mrf.mxu0
        %v1609 = vadd.f32 %v1568, %v1608
        %1610 = vmatmul.f32.gmra.mxu0 %v1164
        %v1611 = vpop.f32.mrf.mxu0
        %v1612 = vadd.f32 %v1571, %v1611
        %1613 = vmatmul.f32.gmra.mxu0 %v1173
        %v1614 = vpop.f32.mrf.mxu0
        %v1615 = vadd.f32 %v1574, %v1614
        %1616 = vmatmul.f32.gmra.mxu0 %v1182
        %v1617 = vpop.f32.mrf.mxu0
        %v1618 = vadd.f32 %v1577, %v1617
        %1619 = vdwg.mxu0
        %1620 = vmatpush.msra.mxu0 %v1312
        %1621 = vmatpush.msra.mxu0 %v1311
        %1622 = vmatpush.msra.mxu0 %v1310
        %1623 = vmatpush.msra.mxu0 %v1309
        %1624 = vmatpush.msra.mxu0 %v1308
        %1625 = vmatpush.msra.mxu0 %v1307
        %1626 = vmatpush.msra.mxu0 %v1306
        %1627 = vmatpush.msra.mxu0 %v1305
        %1628 = vmatpush.msra.mxu0 %v1304
        %1629 = vmatpush.msra.mxu0 %v1303
        %1630 = vmatpush.msra.mxu0 %v1302
        %1631 = vmatpush.msra.mxu0 %v1301
        %1632 = vmatpush.msra.mxu0 %v1300
        %1633 = vmatpush.msra.mxu0 %v1299
        %1634 = vmatpush.msra.mxu0 %v1298
        %1635 = vmatpush.msra.mxu0 %v1297
        %1636 = vmatmul.f32.gmra.mxu0 %v1120
        %v1637 = vpop.f32.mrf.mxu0
        %v1638 = vadd.f32 %v1597, %v1637
        %1639 = vmatmul.f32.gmra.mxu0 %v1129
        %v1640 = vpop.f32.mrf.mxu0
        %v1641 = vadd.f32 %v1600, %v1640
        %1642 = vmatmul.f32.gmra.mxu0 %v1138
        %v1643 = vpop.f32.mrf.mxu0
        %v1644 = vadd.f32 %v1603, %v1643
        %1645 = vmatmul.f32.gmra.mxu0 %v1147
        %v1646 = vpop.f32.mrf.mxu0
        %v1647 = vadd.f32 %v1606, %v1646
        %1648 = vmatmul.f32.gmra.mxu0 %v1156
        %v1649 = vpop.f32.mrf.mxu0
        %v1650 = vadd.f32 %v1609, %v1649
        %1651 = vmatmul.f32.gmra.mxu0 %v1165
        %v1652 = vpop.f32.mrf.mxu0
        %v1653 = vadd.f32 %v1612, %v1652
        %1654 = vmatmul.f32.gmra.mxu0 %v1174
        %v1655 = vpop.f32.mrf.mxu0
        %v1656 = vadd.f32 %v1615, %v1655
        %1657 = vmatmul.f32.gmra.mxu0 %v1183
        %v1658 = vpop.f32.mrf.mxu0
        %v1659 = vadd.f32 %v1618, %v1658
        %1660 = vdwg.mxu0
        %1661 = vmatpush.msra.mxu0 %v1328
        %1662 = vmatpush.msra.mxu0 %v1327
        %1663 = vmatpush.msra.mxu0 %v1326
        %1664 = vmatpush.msra.mxu0 %v1325
        %1665 = vmatpush.msra.mxu0 %v1324
        %1666 = vmatpush.msra.mxu0 %v1323
        %1667 = vmatpush.msra.mxu0 %v1322
        %1668 = vmatpush.msra.mxu0 %v1321
        %1669 = vmatpush.msra.mxu0 %v1320
        %1670 = vmatpush.msra.mxu0 %v1319
        %1671 = vmatpush.msra.mxu0 %v1318
        %1672 = vmatpush.msra.mxu0 %v1317
        %1673 = vmatpush.msra.mxu0 %v1316
        %1674 = vmatpush.msra.mxu0 %v1315
        %1675 = vmatpush.msra.mxu0 %v1314
        %1676 = vmatpush.msra.mxu0 %v1313
        %1677 = vmatmul.f32.gmra.mxu0 %v1121
        %v1678 = vpop.f32.mrf.mxu0
        %v1679 = vadd.f32 %v1638, %v1678
        %1680 = vmatmul.f32.gmra.mxu0 %v1130
        %v1681 = vpop.f32.mrf.mxu0
        %v1682 = vadd.f32 %v1641, %v1681
        %1683 = vmatmul.f32.gmra.mxu0 %v1139
        %v1684 = vpop.f32.mrf.mxu0
        %v1685 = vadd.f32 %v1644, %v1684
        %1686 = vmatmul.f32.gmra.mxu0 %v1148
        %v1687 = vpop.f32.mrf.mxu0
        %v1688 = vadd.f32 %v1647, %v1687
        %1689 = vmatmul.f32.gmra.mxu0 %v1157
        %v1690 = vpop.f32.mrf.mxu0
        %v1691 = vadd.f32 %v1650, %v1690
        %1692 = vmatmul.f32.gmra.mxu0 %v1166
        %v1693 = vpop.f32.mrf.mxu0
        %v1694 = vadd.f32 %v1653, %v1693
        %1695 = vmatmul.f32.gmra.mxu0 %v1175
        %v1696 = vpop.f32.mrf.mxu0
        %v1697 = vadd.f32 %v1656, %v1696
        %1698 = vmatmul.f32.gmra.mxu0 %v1184
        %v1699 = vpop.f32.mrf.mxu0
        %v1700 = vadd.f32 %v1659, %v1699
        %1701 = vdwg.mxu0
        %v1702 = vmul.f32 %v1010, %v1679
        %v1703 = vmul.f32 %v1010, %v1682
        %v1704 = vmul.f32 %v1010, %v1685
        %v1705 = vmul.f32 %v1010, %v1688
        %v1706 = vmul.f32 %v1010, %v1691
        %v1707 = vmul.f32 %v1010, %v1694
        %v1708 = vmul.f32 %v1010, %v1697
        %v1709 = vmul.f32 %v1010, %v1700
        %v1710 = vld [vmem:[%s7] sm:$0x1]
        %v1712 = vperm.slane %v1710, 0
        %v1714 = vadd.f32 %v1702, %v1712
        %v1715 = vadd.f32 %v1703, %v1712
        %v1716 = vadd.f32 %v1704, %v1712
        %v1717 = vadd.f32 %v1705, %v1712
        %v1718 = vadd.f32 %v1706, %v1712
        %v1719 = vadd.f32 %v1707, %v1712
        %v1720 = vadd.f32 %v1708, %v1712
        %v1721 = vadd.f32 %v1709, %v1712
        %v1722 = vld [vmem:[#allocation13] sm:$0xff]
        %v1723 = vld [vmem:[#allocation13 + $0x8] sm:$0xff]
        %v1724 = vld [vmem:[#allocation13 + $0x10] sm:$0xff]
        %v1725 = vld [vmem:[#allocation13 + $0x18] sm:$0xff]
        %v1726 = vld [vmem:[#allocation13 + $0x20] sm:$0xff]
        %v1727 = vld [vmem:[#allocation13 + $0x28] sm:$0xff]
        %v1728 = vld [vmem:[#allocation13 + $0x30] sm:$0xff]
        %v1729 = vld [vmem:[#allocation13 + $0x38] sm:$0xff]
        %v1730 = vld [vmem:[#allocation13 + $0x40] sm:$0xff]
        %v1731 = vld [vmem:[#allocation13 + $0x48] sm:$0xff]
        %v1732 = vld [vmem:[#allocation13 + $0x50] sm:$0xff]
        %v1733 = vld [vmem:[#allocation13 + $0x58] sm:$0xff]
        %v1734 = vld [vmem:[#allocation13 + $0x60] sm:$0xff]
        %v1735 = vld [vmem:[#allocation13 + $0x68] sm:$0xff]
        %v1736 = vld [vmem:[#allocation13 + $0x70] sm:$0xff]
        %v1737 = vld [vmem:[#allocation13 + $0x78] sm:$0xff]
        %v1738 = vld [vmem:[#allocation13 + $0x80] sm:$0xff]
        %v1739 = vld [vmem:[#allocation13 + $0x88] sm:$0xff]
        %v1740 = vld [vmem:[#allocation13 + $0x90] sm:$0xff]
        %v1741 = vld [vmem:[#allocation13 + $0x98] sm:$0xff]
        %v1742 = vld [vmem:[#allocation13 + $0xa0] sm:$0xff]
        %v1743 = vld [vmem:[#allocation13 + $0xa8] sm:$0xff]
        %v1744 = vld [vmem:[#allocation13 + $0xb0] sm:$0xff]
        %v1745 = vld [vmem:[#allocation13 + $0xb8] sm:$0xff]
        %v1746 = vld [vmem:[#allocation13 + $0xc0] sm:$0xff]
        %v1747 = vld [vmem:[#allocation13 + $0xc8] sm:$0xff]
        %v1748 = vld [vmem:[#allocation13 + $0xd0] sm:$0xff]
        %v1749 = vld [vmem:[#allocation13 + $0xd8] sm:$0xff]
        %v1750 = vld [vmem:[#allocation13 + $0xe0] sm:$0xff]
        %v1751 = vld [vmem:[#allocation13 + $0xe8] sm:$0xff]
        %v1752 = vld [vmem:[#allocation13 + $0xf0] sm:$0xff]
        %v1753 = vld [vmem:[#allocation13 + $0xf8] sm:$0xff]
        %v1754 = vld [vmem:[#allocation13 + $0x100] sm:$0xff]
        %v1755 = vld [vmem:[#allocation13 + $0x108] sm:$0xff]
        %v1756 = vld [vmem:[#allocation13 + $0x110] sm:$0xff]
        %v1757 = vld [vmem:[#allocation13 + $0x118] sm:$0xff]
        %v1758 = vld [vmem:[#allocation13 + $0x120] sm:$0xff]
        %v1759 = vld [vmem:[#allocation13 + $0x128] sm:$0xff]
        %v1760 = vld [vmem:[#allocation13 + $0x130] sm:$0xff]
        %v1761 = vld [vmem:[#allocation13 + $0x138] sm:$0xff]
        %v1762 = vld [vmem:[#allocation13 + $0x140] sm:$0xff]
        %v1763 = vld [vmem:[#allocation13 + $0x148] sm:$0xff]
        %v1764 = vld [vmem:[#allocation13 + $0x150] sm:$0xff]
        %v1765 = vld [vmem:[#allocation13 + $0x158] sm:$0xff]
        %v1766 = vld [vmem:[#allocation13 + $0x160] sm:$0xff]
        %v1767 = vld [vmem:[#allocation13 + $0x168] sm:$0xff]
        %v1768 = vld [vmem:[#allocation13 + $0x170] sm:$0xff]
        %v1769 = vld [vmem:[#allocation13 + $0x178] sm:$0xff]
        %v1770 = vld [vmem:[#allocation13 + $0x180] sm:$0xff]
        %v1771 = vld [vmem:[#allocation13 + $0x188] sm:$0xff]
        %v1772 = vld [vmem:[#allocation13 + $0x190] sm:$0xff]
        %v1773 = vld [vmem:[#allocation13 + $0x198] sm:$0xff]
        %v1774 = vld [vmem:[#allocation13 + $0x1a0] sm:$0xff]
        %v1775 = vld [vmem:[#allocation13 + $0x1a8] sm:$0xff]
        %v1776 = vld [vmem:[#allocation13 + $0x1b0] sm:$0xff]
        %v1777 = vld [vmem:[#allocation13 + $0x1b8] sm:$0xff]
        %v1778 = vld [vmem:[#allocation13 + $0x1c0] sm:$0xff]
        %v1779 = vld [vmem:[#allocation13 + $0x1c8] sm:$0xff]
        %v1780 = vld [vmem:[#allocation13 + $0x1d0] sm:$0xff]
        %v1781 = vld [vmem:[#allocation13 + $0x1d8] sm:$0xff]
        %v1782 = vld [vmem:[#allocation13 + $0x1e0] sm:$0xff]
        %v1783 = vld [vmem:[#allocation13 + $0x1e8] sm:$0xff]
        %v1784 = vld [vmem:[#allocation13 + $0x1f0] sm:$0xff]
        %v1785 = vld [vmem:[#allocation13 + $0x1f8] sm:$0xff]
        %1786 = vmatpush.msra.mxu0 %v1782
        %1787 = vmatpush.msra.mxu0 %v1778
        %1788 = vmatpush.msra.mxu0 %v1774
        %1789 = vmatpush.msra.mxu0 %v1770
        %1790 = vmatpush.msra.mxu0 %v1766
        %1791 = vmatpush.msra.mxu0 %v1762
        %1792 = vmatpush.msra.mxu0 %v1758
        %1793 = vmatpush.msra.mxu0 %v1754
        %1794 = vmatpush.msra.mxu0 %v1750
        %1795 = vmatpush.msra.mxu0 %v1746
        %1796 = vmatpush.msra.mxu0 %v1742
        %1797 = vmatpush.msra.mxu0 %v1738
        %1798 = vmatpush.msra.mxu0 %v1734
        %1799 = vmatpush.msra.mxu0 %v1730
        %1800 = vmatpush.msra.mxu0 %v1726
        %1801 = vmatpush.msra.mxu0 %v1722
        %1802 = vmatmul.f32.gmra.mxu0 %v991
        %v1803 = vpop.f32.mrf.mxu0
        %v1804 = vadd.f32 0.0, %v1803
        %1805 = vmatmul.f32.gmra.mxu0 %v994
        %v1806 = vpop.f32.mrf.mxu0
        %v1807 = vadd.f32 0.0, %v1806
        %1808 = vdwg.mxu0
        %1809 = vmatpush.msra.mxu0 %v1783
        %1810 = vmatpush.msra.mxu0 %v1779
        %1811 = vmatpush.msra.mxu0 %v1775
        %1812 = vmatpush.msra.mxu0 %v1771
        %1813 = vmatpush.msra.mxu0 %v1767
        %1814 = vmatpush.msra.mxu0 %v1763
        %1815 = vmatpush.msra.mxu0 %v1759
        %1816 = vmatpush.msra.mxu0 %v1755
        %1817 = vmatpush.msra.mxu0 %v1751
        %1818 = vmatpush.msra.mxu0 %v1747
        %1819 = vmatpush.msra.mxu0 %v1743
        %1820 = vmatpush.msra.mxu0 %v1739
        %1821 = vmatpush.msra.mxu0 %v1735
        %1822 = vmatpush.msra.mxu0 %v1731
        %1823 = vmatpush.msra.mxu0 %v1727
        %1824 = vmatpush.msra.mxu0 %v1723
        %1825 = vmatmul.f32.gmra.mxu0 %v991
        %v1826 = vpop.f32.mrf.mxu0
        %v1827 = vadd.f32 0.0, %v1826
        %1828 = vmatmul.f32.gmra.mxu0 %v994
        %v1829 = vpop.f32.mrf.mxu0
        %v1830 = vadd.f32 0.0, %v1829
        %1831 = vdwg.mxu0
        %1832 = vmatpush.msra.mxu0 %v1784
        %1833 = vmatpush.msra.mxu0 %v1780
        %1834 = vmatpush.msra.mxu0 %v1776
        %1835 = vmatpush.msra.mxu0 %v1772
        %1836 = vmatpush.msra.mxu0 %v1768
        %1837 = vmatpush.msra.mxu0 %v1764
        %1838 = vmatpush.msra.mxu0 %v1760
        %1839 = vmatpush.msra.mxu0 %v1756
        %1840 = vmatpush.msra.mxu0 %v1752
        %1841 = vmatpush.msra.mxu0 %v1748
        %1842 = vmatpush.msra.mxu0 %v1744
        %1843 = vmatpush.msra.mxu0 %v1740
        %1844 = vmatpush.msra.mxu0 %v1736
        %1845 = vmatpush.msra.mxu0 %v1732
        %1846 = vmatpush.msra.mxu0 %v1728
        %1847 = vmatpush.msra.mxu0 %v1724
        %1848 = vmatmul.f32.gmra.mxu0 %v991
        %v1849 = vpop.f32.mrf.mxu0
        %v1850 = vadd.f32 0.0, %v1849
        %1851 = vmatmul.f32.gmra.mxu0 %v994
        %v1852 = vpop.f32.mrf.mxu0
        %v1853 = vadd.f32 0.0, %v1852
        %1854 = vdwg.mxu0
        %1855 = vmatpush.msra.mxu0 %v1785
        %1856 = vmatpush.msra.mxu0 %v1781
        %1857 = vmatpush.msra.mxu0 %v1777
        %1858 = vmatpush.msra.mxu0 %v1773
        %1859 = vmatpush.msra.mxu0 %v1769
        %1860 = vmatpush.msra.mxu0 %v1765
        %1861 = vmatpush.msra.mxu0 %v1761
        %1862 = vmatpush.msra.mxu0 %v1757
        %1863 = vmatpush.msra.mxu0 %v1753
        %1864 = vmatpush.msra.mxu0 %v1749
        %1865 = vmatpush.msra.mxu0 %v1745
        %1866 = vmatpush.msra.mxu0 %v1741
        %1867 = vmatpush.msra.mxu0 %v1737
        %1868 = vmatpush.msra.mxu0 %v1733
        %1869 = vmatpush.msra.mxu0 %v1729
        %1870 = vmatpush.msra.mxu0 %v1725
        %1871 = vmatmul.f32.gmra.mxu0 %v991
        %v1872 = vpop.f32.mrf.mxu0
        %v1873 = vadd.f32 0.0, %v1872
        %1874 = vmatmul.f32.gmra.mxu0 %v994
        %v1875 = vpop.f32.mrf.mxu0
        %v1876 = vadd.f32 0.0, %v1875
        %1877 = vdwg.mxu0
        %v1882 = vrot.slane %v1827, 4
        %v1883 = vrot.slane %v1830, 4
        %vm1884 = vcmask 1043456
        %v1885 = vsel %vm1884, %v1804, %v1882
        %v1886 = vsel %vm1884, %v1882, %v1804
        %v1887 = vrot.slane %v1886, 4
        %v1888 = vsel %vm1884, %v1807, %v1883
        %v1889 = vsel %vm1884, %v1883, %v1807
        %v1890 = vrot.slane %v1889, 4
        %v1896 = vunpack.c.l.s4 1935823168
        %v1897 = vunpack.c.0.s8 %v1896
        %v1898 = vperm.slane %v1885, %v1897
        %v1900 = vunpack.c.l.s4 1935823168
        %v1901 = vunpack.c.0.s8 %v1900
        %v1902 = vperm.slane %v1887, %v1901
        %v1904 = vunpack.c.l.s4 1935823168
        %v1905 = vunpack.c.0.s8 %v1904
        %v1906 = vperm.slane %v1888, %v1905
        %v1908 = vunpack.c.l.s4 1935823168
        %v1909 = vunpack.c.0.s8 %v1908
        %v1910 = vperm.slane %v1890, %v1909
        %v1911 = vadd.f32 %v1714, %v1898
        %v1912 = vadd.f32 %v1716, %v1902
        %v1913 = vadd.f32 %v1718, %v1906
        %v1914 = vadd.f32 %v1720, %v1910
        %1915 = vst [vmem:[%s416] sm:$0xff] %v1911
        %1916 = vst [vmem:[%s416 + $0x10] sm:$0xff] %v1912
        %1917 = vst [vmem:[%s416 + $0x20] sm:$0xff] %v1913
        %1918 = vst [vmem:[%s416 + $0x30] sm:$0xff] %v1914
        %v1923 = vrot.slane %v1873, 4
        %v1924 = vrot.slane %v1876, 4
        %v1925 = vsel %vm1884, %v1850, %v1923
        %v1926 = vsel %vm1884, %v1923, %v1850
        %v1927 = vrot.slane %v1926, 4
        %v1928 = vsel %vm1884, %v1853, %v1924
        %v1929 = vsel %vm1884, %v1924, %v1853
        %v1930 = vrot.slane %v1929, 4
        %v1936 = vunpack.c.l.s4 1935823168
        %v1937 = vunpack.c.0.s8 %v1936
        %v1938 = vperm.slane %v1925, %v1937
        %v1940 = vunpack.c.l.s4 1935823168
        %v1941 = vunpack.c.0.s8 %v1940
        %v1942 = vperm.slane %v1927, %v1941
        %v1944 = vunpack.c.l.s4 1935823168
        %v1945 = vunpack.c.0.s8 %v1944
        %v1946 = vperm.slane %v1928, %v1945
        %v1948 = vunpack.c.l.s4 1935823168
        %v1949 = vunpack.c.0.s8 %v1948
        %v1950 = vperm.slane %v1930, %v1949
        %v1951 = vadd.f32 %v1715, %v1938
        %v1952 = vadd.f32 %v1717, %v1942
        %v1953 = vadd.f32 %v1719, %v1946
        %v1954 = vadd.f32 %v1721, %v1950
        %s1955 = scalar_lea.vmem %s416, 8 [#allocation14]
        %1956 = vst [vmem:[%s1955] sm:$0xff] %v1951
        %1957 = vst [vmem:[%s1955 + $0x10] sm:$0xff] %v1952
        %1958 = vst [vmem:[%s1955 + $0x20] sm:$0xff] %v1953
        %1959 = vst [vmem:[%s1955 + $0x30] sm:$0xff] %v1954
        %s1960 = sand.u32 %s215, 1
        %s1961 = scalar_lea.sflag [#allocation7], %s1960
        %s1962 = sand.u32 %s215, 1
        %s1963 = smul.addr %s1962, 64
        %s1964 = scalar_lea.vmem [#allocation14], %s1963
        // Predicated region
        $region73: #{tpu_custom_call.1} parent=51 // pred_check
          %p1965 = pneg %p225
        $region74: #{tpu_custom_call.1} parent=51 // pred_check_branch
          %1967 = sbr.rel (%p1965) target = $region76
        $region75: #{tpu_custom_call.1} parent=51 // pred_region
          %s1968 = smul.u32 4, %s29
          %1970 = vsyncadd %s1961, 0
          %s1971 = smul.addr %s1968, 2
          %s1972 = smul.addr %s1971, 8
          %s1973 = scalar_lea.hbm %s8, %s1972
          %s1974 = sshll.u32 %s1964, 4
          %s1975 = int_to_ptr.vmem [resolvable:$true] %s1974
          %s1976 = sshll.u32 %s1973, 4
          %s1977 = int_to_ptr.hbm [resolvable:$true] %s1976
          %1982 = dma.vmem_to_hbm [thread:$0]  %s1975, 1024, %s1977, %s1961, 128, 128, 8
        $region76: #{tpu_custom_call.1} parent=51 // pred_fallthru
          _
      $region52: #{tpu_custom_call.1} parent=5 // pred_fallthru
        _
      %p1983 = scmp.le.s32.totalorder 2, %s24
      // Predicated region
      $region77: #{tpu_custom_call.1} parent=5 // pred_check
        %p1984 = pneg %p1983
      $region78: #{tpu_custom_call.1} parent=5 // pred_check_branch
        %1986 = sbr.rel (%p1984) target = $region80
      $region79: #{tpu_custom_call.1} parent=5 // pred_region
        %s1987 = ssub.s32 %s24, 2
        // Predicated region
        $region81: #{tpu_custom_call.1} parent=79 // pred_check
          %p1988 = pneg %p231
        $region82: #{tpu_custom_call.1} parent=79 // pred_check_branch
          %1990 = sbr.rel (%p1988) target = $region84
        $region83: #{tpu_custom_call.1} parent=79 // pred_region
          %s1991 = sand.u32 %s216, 1
          %s1992 = scalar_lea.sflag [#allocation7], %s1991
          %s1993 = sand.u32 %s216, 1
          %s1994 = smul.addr %s1993, 64
          %s1995 = scalar_lea.vmem [#allocation14], %s1994
          %1997 = dma.done %s1992, 1024
        $region84: #{tpu_custom_call.1} parent=79 // pred_fallthru
          _
      $region80: #{tpu_custom_call.1} parent=5 // pred_fallthru
        _
    $region6: #{tpu_custom_call.1} parent=1 // loop_footer
      %s28 = sadd.s32 1, %s24
    $region7: #{tpu_custom_call.1} parent=1 // loop_footer_branch
      %23 = sbr.rel target = $region3
    $region8: #{tpu_custom_call.1} parent=1 // loop_exit
      _
    %1998 = vsyncpa [#allocation6], 1
    %s1999 = scalar_lea.sflag [#allocation6], 1
    %2000 = vsyncpa %s1999, 1
    %2001 = vsyncpa [#allocation9], 1
    %s2002 = scalar_lea.sflag [#allocation9], 1
    %2003 = vsyncpa %s2002, 1
    %2004 = vsyncpa [#allocation12], 1
    %2005 = vsyncpa [#allocation7], 1
    %s2006 = scalar_lea.sflag [#allocation7], 1
    %2007 = vsyncpa %s2006, 1

</llo_original>
